<compile_context>
chip_gen: v7x
topology: tpu7x:2x2x1
jax: 0.10.0
libtpu: 0.0.40
codegen_flags: <defaults>
</compile_context>

<pallas_src>
import functools

import jax
import jax.numpy as jnp
from jax.experimental import pallas as pl
from jax.experimental.pallas import tpu as pltpu


FEATURE_SIZE = 1000   # forward() hard-codes the [:, 0:1000] feature slice
BOX_SIZE = 6          # and the [:, 1000:1006] box code


def _is_v5_class() -> bool:
    """True on v5e/v5p (128-deep MXU) -> keep the split second matmul."""
    try:
        kind = jax.devices()[0].device_kind.lower()
    except Exception:
        return False
    return "v5" in kind


def _adj_encoder_kernel(left_ref, right_ref,
                        w_left_ref, b_left_ref, w_right_ref,
                        w_layout_ref, b_layout_ref,
                        w_second_ref, b_sec_ref,
                        o_ref, *, feat: int, nbox: int, hidden: int,
                        fuse_second: bool):
    left = left_ref[...]                      # (TB, feat + nbox) f32
    right = right_ref[...]

    # bf16 MXU operands, f32 accumulation.
    x_l = left[:, :feat].astype(jnp.bfloat16)       # (TB, feat)
    x_r = right[:, :feat].astype(jnp.bfloat16)
    box1 = left[:, feat:feat + nbox]                # (TB, 6) f32 (stays exact)
    box2 = right[:, feat:feat + nbox]

    # left / right Linear (right has no bias) + tanh
    h = jnp.dot(x_l, w_left_ref[...], preferred_element_type=jnp.float32)
    h = h + jnp.dot(x_r, w_right_ref[...], preferred_element_type=jnp.float32)
    h = jnp.tanh(h + b_left_ref[...])                                  # (TB, H) f32

    # layout(): relative-position code (columns 4..6 are always zero)
    d0 = box1[:, 5:6] - box2[:, 5:6]
    d1 = box1[:, 5:6] - box2[:, 2:3]
    d2 = box1[:, 2:3] - box2[:, 5:6]
    cx = (box1[:, 0:1] + box1[:, 3:4]) * 0.5 - (box2[:, 0:1] + box2[:, 3:4]) * 0.5
    cy = (box1[:, 1:2] + box1[:, 4:5]) * 0.5 - (box2[:, 1:2] + box2[:, 4:5]) * 0.5
    cz = (box1[:, 2:3] + box1[:, 5:6]) * 0.5 - (box2[:, 2:3] + box2[:, 5:6]) * 0.5
    d3 = jnp.sqrt(cx * cx + cy * cy + cz * cz)

    # layoutFC: only layout columns 0..3 are nonzero -> 4 broadcast FMAs + bias
    # (pure VPU work, kept in f32).
    lf = (b_layout_ref[...]
          + d0 * w_layout_ref[0:1, :]
          + d1 * w_layout_ref[1:2, :]
          + d2 * w_layout_ref[2:3, :]
          + d3 * w_layout_ref[3:4, :])                                 # (TB, 100)

    # second Linear on cat([h, lf], 1) + tanh.
    if fuse_second:
        # v6e/v7x: one K=132 pass (single K-tile on a 256-deep MXU); the lane
        # concat of h (32 lanes) and lf (100 lanes) is a few XLU ops, free
        # relative to the saved MXU pushes and the removed f32 partial-sum add.
        hl = jnp.concatenate([h, lf], axis=-1).astype(jnp.bfloat16)    # (TB, 132)
        out = jnp.dot(hl, w_second_ref[...], preferred_element_type=jnp.float32)
    else:
        # v5-class: 128-deep MXU -> fusing buys nothing; keep the split matmul.
        out = jnp.dot(h.astype(jnp.bfloat16), w_second_ref[:hidden, :],
                      preferred_element_type=jnp.float32)
        out = out + jnp.dot(lf.astype(jnp.bfloat16), w_second_ref[hidden:, :],
                            preferred_element_type=jnp.float32)
    out = jnp.tanh(out + b_sec_ref[...])                               # (TB, feat)

    # merge_box_code: elementwise max on cols 0..2, min on cols 3..5 (f32, exact)
    mb = jnp.concatenate([jnp.maximum(box1[:, 0:3], box2[:, 0:3]),
                          jnp.minimum(box1[:, 3:6], box2[:, 3:6])], axis=-1)

    # Two direct stores instead of a lane concat of [out | mb] -> no extra
    # (TB, 1006) f32 intermediate while the matmul results are live.
    o_ref[:, :feat] = out.astype(o_ref.dtype)
    o_ref[:, feat:] = mb.astype(o_ref.dtype)


def adj_encoder_forward(left, right, params, *, tile_b=None, fuse_second=None):
    """Pallas equivalent of AdjEncoder.forward(left_input, right_input)."""
    B, F = left.shape
    assert right.shape == (B, F)
    feat, nbox = FEATURE_SIZE, BOX_SIZE
    assert F == feat + nbox, "inputs must be [B, 1006] (1000 features + 6-box code)"

    hidden = params["w_left"].shape[1]
    lay = params["w_layout"].shape[1]

    # bf16 storage for the MXU weights (one-time cast outside the kernel; for a
    # real model keep them in bf16 permanently).  W_second is pre-concatenated
    # so the fused path is a single (TB,132) @ (132,1000) matmul.
    w_left = params["w_left"].astype(jnp.bfloat16)
    w_right = params["w_right"].astype(jnp.bfloat16)
    w_second = jnp.concatenate([params["w_sec_h"], params["w_sec_l"]],
                               axis=0).astype(jnp.bfloat16)            # (H+100, feat)

    if fuse_second is None:
        fuse_second = not _is_v5_class()

    if tile_b is None:
        if B <= 8:
            tile_b = B                       # one sub-8 block must equal B exactly
        else:
            # Guarantee >=2 grid steps so v7x's two TensorCores both get work
            # (no-op on 1-TC v5e/v6e); cap at 512 rows per tile (bigger tiles
            # amortize per-step overhead and MXU weight reloads).
            half = -(-B // 2)
            tile_b = min(512, ((half + 7) // 8) * 8)
            # Prefer tile_b values dividing B to avoid wasted MXU work on the
            # padded rows of the last tile (results stay correct either way:
            # Pallas masks the out-of-range stores).

    grid = (pl.cdiv(B, tile_b),)

    # Explicit scoped-VMEM limit sized to the double-buffered footprint
    # (left/right/out tiles x2 buffers + resident weights x2), with headroom.
    itemsize = jnp.dtype(left.dtype).itemsize
    io_block = tile_b * F * itemsize
    weight_arrays = (w_left, params["b_left"], w_right,
                     params["w_layout"], params["b_layout"],
                     w_second, params["b_sec"])
    w_bytes = sum(int(w.size) * jnp.dtype(w.dtype).itemsize for w in weight_arrays)
    footprint = 2 * 3 * io_block + 2 * w_bytes
    vmem_limit = min(int(1.25 * footprint) + (8 << 20), 48 << 20)

    batch_in_spec = pl.BlockSpec((tile_b, F), lambda i: (i, 0))

    def resident(shape):   # weight stays at the same block for every grid step
        return pl.BlockSpec(shape, lambda i: (0, 0))

    kernel = functools.partial(_adj_encoder_kernel, feat=feat, nbox=nbox,
                               hidden=hidden, fuse_second=fuse_second)

    return pl.pallas_call(
        kernel,
        out_shape=jax.ShapeDtypeStruct((B, feat + nbox), left.dtype),
        grid_spec=pl.GridSpec(
            grid=grid,
            in_specs=[
                batch_in_spec,                     # left_input
                batch_in_spec,                     # right_input
                resident((feat, hidden)),          # w_left   (in, out) bf16
                resident((1, hidden)),             # b_left   f32
                resident((feat, hidden)),          # w_right  bf16 (bias=False)
                resident((7, lay)),                # w_layout f32 (in, out)
                resident((1, lay)),                # b_layout f32
                resident((hidden + lay, feat)),    # w_second bf16 [h rows | lf rows]
                resident((1, feat)),               # b_second f32
            ],
            out_specs=pl.BlockSpec((tile_b, feat + nbox), lambda i: (i, 0)),
        ),
        compiler_params=pltpu.CompilerParams(
            dimension_semantics=("parallel",),
            vmem_limit_bytes=vmem_limit,
        ),
    )(left, right,
      w_left, params["b_left"], w_right,
      params["w_layout"], params["b_layout"],
      w_second, params["b_sec"])


def init_adj_encoder_params(key, feature_size=FEATURE_SIZE, hidden_size=32):
    """nn.Linear-style init; weights stored as [in, out] (i.e. W^T) for x @ W."""
    ks = jax.random.split(key, 8)

    def u(k, shape, fan_in):
        b = 1.0 / float(fan_in) ** 0.5
        return jax.random.uniform(k, shape, jnp.float32, -b, b)

    return {
        "w_left":   u(ks[0], (feature_size, hidden_size), feature_size),
        "b_left":   u(ks[1], (1, hidden_size), feature_size),
        "w_right":  u(ks[2], (feature_size, hidden_size), feature_size),
        "w_layout": u(ks[3], (7, 100), 7),
        "b_layout": u(ks[4], (1, 100), 7),
        # second = Linear(hidden+100, feature_size), split into [h | layout] rows
        "w_sec_h":  u(ks[5], (hidden_size, feature_size), hidden_size + 100),
        "w_sec_l":  u(ks[6], (100, feature_size), hidden_size + 100),
        "b_sec":    u(ks[7], (1, feature_size), hidden_size + 100),
    }


def adj_encoder_ref(left, right, params):
    """Pure-JAX f32 reference mirroring the PyTorch forward literally."""
    feat, nbox = FEATURE_SIZE, BOX_SIZE
    x_l, box1 = left[:, :feat], left[:, feat:feat + nbox]
    x_r, box2 = right[:, :feat], right[:, feat:feat + nbox]

    h = jnp.tanh(x_l @ params["w_left"] + params["b_left"] + x_r @ params["w_right"])

    B = left.shape[0]
    lc = jnp.zeros((B, 7), jnp.float32)
    lc = lc.at[:, 0].set(box1[:, 5] - box2[:, 5])
    lc = lc.at[:, 1].set(box1[:, 5] - box2[:, 2])
    lc = lc.at[:, 2].set(box1[:, 2] - box2[:, 5])
    dsq = ((box1[:, 0] + box1[:, 3]) * 0.5 - (box2[:, 0] + box2[:, 3]) * 0.5) ** 2 \
        + ((box1[:, 1] + box1[:, 4]) * 0.5 - (box2[:, 1] + box2[:, 4]) * 0.5) ** 2 \
        + ((box1[:, 2] + box1[:, 5]) * 0.5 - (box2[:, 2] + box2[:, 5]) * 0.5) ** 2
    lc = lc.at[:, 3].set(jnp.sqrt(dsq))

    mb = jnp.concatenate([jnp.maximum(box1[:, 0:3], box2[:, 0:3]),
                          jnp.minimum(box1[:, 3:6], box2[:, 3:6])], axis=1)

    lf = lc @ params["w_layout"] + params["b_layout"]
    w_second = jnp.concatenate([params["w_sec_h"], params["w_sec_l"]], axis=0)
    out = jnp.tanh(jnp.concatenate([h, lf], axis=1) @ w_second + params["b_sec"])
    return jnp.concatenate([out, mb], axis=1)


if __name__ == "__main__":
    key = jax.random.PRNGKey(0)
    k_l, k_r, k_p = jax.random.split(key, 3)

    batch = 4
    hidden_size = 32
    width = FEATURE_SIZE + BOX_SIZE   # 1006 — required by the hard-coded slices

    params = init_adj_encoder_params(k_p, FEATURE_SIZE, hidden_size)
    left = jax.random.normal(k_l, (batch, width), dtype=jnp.float32)
    right = jax.random.normal(k_r, (batch, width), dtype=jnp.float32)

    out = adj_encoder_forward(left, right, params)
    out = jax.block_until_ready(out)
    ref = adj_encoder_ref(left, right, params)

    assert out.shape == (batch, width), (out.shape, (batch, width))
    # merge-box tail never touches the MXU / bf16 path -> must be bit-exact
    assert jnp.array_equal(out[:, -BOX_SIZE:], ref[:, -BOX_SIZE:]), "merge_box mismatch"
    # bf16 MXU operands with f32 accumulation vs. an all-f32 XLA reference
    assert jnp.allclose(out, ref, atol=3e-2, rtol=1e-2), \
        float(jnp.max(jnp.abs(out - ref)))

    # Also exercise the multi-step grid path (tile_b heuristic -> 2 grid steps,
    # last tile partially padded).
    batch2 = 24
    left2 = jax.random.normal(jax.random.PRNGKey(1), (batch2, width), jnp.float32)
    right2 = jax.random.normal(jax.random.PRNGKey(2), (batch2, width), jnp.float32)
    out2 = jax.block_until_ready(adj_encoder_forward(left2, right2, params))
    ref2 = adj_encoder_ref(left2, right2, params)
    assert jnp.array_equal(out2[:, -BOX_SIZE:], ref2[:, -BOX_SIZE:])
    assert jnp.allclose(out2, ref2, atol=3e-2, rtol=1e-2), \
        float(jnp.max(jnp.abs(out2 - ref2)))

    print("KERNEL_OK")
</pallas_src>

<mosaic_0001>
module attributes {stable_mosaic.version = 11 : i64} {
  func.func @_adj_encoder_kernel(%arg0: i32, %arg1: memref<4x1006xf32, #tpu.memory_space<vmem>>, %arg2: memref<4x1006xf32, #tpu.memory_space<vmem>>, %arg3: memref<1000x32xbf16, #tpu.memory_space<vmem>>, %arg4: memref<1x32xf32, #tpu.memory_space<vmem>>, %arg5: memref<1000x32xbf16, #tpu.memory_space<vmem>>, %arg6: memref<7x100xf32, #tpu.memory_space<vmem>>, %arg7: memref<1x100xf32, #tpu.memory_space<vmem>>, %arg8: memref<132x1000xbf16, #tpu.memory_space<vmem>>, %arg9: memref<1x1000xf32, #tpu.memory_space<vmem>>, %arg10: memref<4x1006xf32, #tpu.memory_space<vmem>>) attributes {dimension_semantics = [#tpu.dimension_semantics<parallel>], iteration_bounds = array<i64: 1>, scalar_prefetch = 0 : i64, scratch_operands = 0 : i64, tpu.core_type = #tpu.core_type<tc>, window_params = [{transform_indices = @transform_0, window_bounds = array<i64: 4, 1006>}, {transform_indices = @transform_1, window_bounds = array<i64: 4, 1006>}, {pipeline_mode = #tpu.pipeline_mode<synchronous>, transform_indices = @transform_2, window_bounds = array<i64: 1000, 32>}, {pipeline_mode = #tpu.pipeline_mode<synchronous>, transform_indices = @transform_3, window_bounds = array<i64: 1, 32>}, {pipeline_mode = #tpu.pipeline_mode<synchronous>, transform_indices = @transform_4, window_bounds = array<i64: 1000, 32>}, {pipeline_mode = #tpu.pipeline_mode<synchronous>, transform_indices = @transform_5, window_bounds = array<i64: 7, 100>}, {pipeline_mode = #tpu.pipeline_mode<synchronous>, transform_indices = @transform_6, window_bounds = array<i64: 1, 100>}, {pipeline_mode = #tpu.pipeline_mode<synchronous>, transform_indices = @transform_7, window_bounds = array<i64: 132, 1000>}, {pipeline_mode = #tpu.pipeline_mode<synchronous>, transform_indices = @transform_8, window_bounds = array<i64: 1, 1000>}, {transform_indices = @transform_9, window_bounds = array<i64: 4, 1006>}]} {
    %c0 = arith.constant 0 : index
    %c0_0 = arith.constant 0 : index
    %0 = vector.load %arg1[%c0, %c0_0] : memref<4x1006xf32, #tpu.memory_space<vmem>>, vector<4x1006xf32>
    %c0_1 = arith.constant 0 : index
    %c0_2 = arith.constant 0 : index
    %1 = vector.load %arg2[%c0_1, %c0_2] : memref<4x1006xf32, #tpu.memory_space<vmem>>, vector<4x1006xf32>
    %2 = vector.extract_strided_slice %0 {offsets = [0, 0], sizes = [4, 1000], strides = [1, 1]} : vector<4x1006xf32> to vector<4x1000xf32>
    %3 = arith.truncf %2 : vector<4x1000xf32> to vector<4x1000xbf16>
    %4 = vector.extract_strided_slice %1 {offsets = [0, 0], sizes = [4, 1000], strides = [1, 1]} : vector<4x1006xf32> to vector<4x1000xf32>
    %5 = arith.truncf %4 : vector<4x1000xf32> to vector<4x1000xbf16>
    %6 = vector.extract_strided_slice %0 {offsets = [0, 1000], sizes = [4, 6], strides = [1, 1]} : vector<4x1006xf32> to vector<4x6xf32>
    %7 = vector.extract_strided_slice %1 {offsets = [0, 1000], sizes = [4, 6], strides = [1, 1]} : vector<4x1006xf32> to vector<4x6xf32>
    %c0_3 = arith.constant 0 : index
    %c0_4 = arith.constant 0 : index
    %8 = vector.load %arg3[%c0_3, %c0_4] : memref<1000x32xbf16, #tpu.memory_space<vmem>>, vector<1000x32xbf16>
    %cst = arith.constant dense<0.000000e+00> : vector<4x32xf32>
    %9 = tpu.matmul %3, %8, %cst {dimension_numbers = #tpu.dot_dimension_numbers<[1], [0], [0], [1], [0, 0, 1, 1], [], []>} : vector<4x1000xbf16>, vector<1000x32xbf16>, vector<4x32xf32> -> vector<4x32xf32>
    %c0_5 = arith.constant 0 : index
    %c0_6 = arith.constant 0 : index
    %10 = vector.load %arg5[%c0_5, %c0_6] : memref<1000x32xbf16, #tpu.memory_space<vmem>>, vector<1000x32xbf16>
    %cst_7 = arith.constant dense<0.000000e+00> : vector<4x32xf32>
    %11 = tpu.matmul %5, %10, %cst_7 {dimension_numbers = #tpu.dot_dimension_numbers<[1], [0], [0], [1], [0, 0, 1, 1], [], []>} : vector<4x1000xbf16>, vector<1000x32xbf16>, vector<4x32xf32> -> vector<4x32xf32>
    %12 = arith.addf %9, %11 : vector<4x32xf32>
    %c0_8 = arith.constant 0 : index
    %c0_9 = arith.constant 0 : index
    %13 = vector.load %arg4[%c0_8, %c0_9] : memref<1x32xf32, #tpu.memory_space<vmem>>, vector<1x32xf32>
    %14 = vector.broadcast %13 : vector<1x32xf32> to vector<4x32xf32>
    %15 = arith.addf %12, %14 : vector<4x32xf32>
    %16 = math.tanh %15 : vector<4x32xf32>
    %17 = vector.extract_strided_slice %6 {offsets = [0, 5], sizes = [4, 1], strides = [1, 1]} : vector<4x6xf32> to vector<4x1xf32>
    %18 = vector.extract_strided_slice %7 {offsets = [0, 5], sizes = [4, 1], strides = [1, 1]} : vector<4x6xf32> to vector<4x1xf32>
    %19 = arith.subf %17, %18 : vector<4x1xf32>
    %20 = vector.extract_strided_slice %6 {offsets = [0, 5], sizes = [4, 1], strides = [1, 1]} : vector<4x6xf32> to vector<4x1xf32>
    %21 = vector.extract_strided_slice %7 {offsets = [0, 2], sizes = [4, 1], strides = [1, 1]} : vector<4x6xf32> to vector<4x1xf32>
    %22 = arith.subf %20, %21 : vector<4x1xf32>
    %23 = vector.extract_strided_slice %6 {offsets = [0, 2], sizes = [4, 1], strides = [1, 1]} : vector<4x6xf32> to vector<4x1xf32>
    %24 = vector.extract_strided_slice %7 {offsets = [0, 5], sizes = [4, 1], strides = [1, 1]} : vector<4x6xf32> to vector<4x1xf32>
    %25 = arith.subf %23, %24 : vector<4x1xf32>
    %26 = vector.extract_strided_slice %6 {offsets = [0, 0], sizes = [4, 1], strides = [1, 1]} : vector<4x6xf32> to vector<4x1xf32>
    %27 = vector.extract_strided_slice %6 {offsets = [0, 3], sizes = [4, 1], strides = [1, 1]} : vector<4x6xf32> to vector<4x1xf32>
    %28 = arith.addf %26, %27 : vector<4x1xf32>
    %cst_10 = arith.constant 5.000000e-01 : f32
    %29 = vector.broadcast %cst_10 : f32 to vector<4x1xf32>
    %30 = arith.mulf %28, %29 : vector<4x1xf32>
    %31 = vector.extract_strided_slice %7 {offsets = [0, 0], sizes = [4, 1], strides = [1, 1]} : vector<4x6xf32> to vector<4x1xf32>
    %32 = vector.extract_strided_slice %7 {offsets = [0, 3], sizes = [4, 1], strides = [1, 1]} : vector<4x6xf32> to vector<4x1xf32>
    %33 = arith.addf %31, %32 : vector<4x1xf32>
    %cst_11 = arith.constant 5.000000e-01 : f32
    %34 = vector.broadcast %cst_11 : f32 to vector<4x1xf32>
    %35 = arith.mulf %33, %34 : vector<4x1xf32>
    %36 = arith.subf %30, %35 : vector<4x1xf32>
    %37 = vector.extract_strided_slice %6 {offsets = [0, 1], sizes = [4, 1], strides = [1, 1]} : vector<4x6xf32> to vector<4x1xf32>
    %38 = vector.extract_strided_slice %6 {offsets = [0, 4], sizes = [4, 1], strides = [1, 1]} : vector<4x6xf32> to vector<4x1xf32>
    %39 = arith.addf %37, %38 : vector<4x1xf32>
    %cst_12 = arith.constant 5.000000e-01 : f32
    %40 = vector.broadcast %cst_12 : f32 to vector<4x1xf32>
    %41 = arith.mulf %39, %40 : vector<4x1xf32>
    %42 = vector.extract_strided_slice %7 {offsets = [0, 1], sizes = [4, 1], strides = [1, 1]} : vector<4x6xf32> to vector<4x1xf32>
    %43 = vector.extract_strided_slice %7 {offsets = [0, 4], sizes = [4, 1], strides = [1, 1]} : vector<4x6xf32> to vector<4x1xf32>
    %44 = arith.addf %42, %43 : vector<4x1xf32>
    %cst_13 = arith.constant 5.000000e-01 : f32
    %45 = vector.broadcast %cst_13 : f32 to vector<4x1xf32>
    %46 = arith.mulf %44, %45 : vector<4x1xf32>
    %47 = arith.subf %41, %46 : vector<4x1xf32>
    %48 = vector.extract_strided_slice %6 {offsets = [0, 2], sizes = [4, 1], strides = [1, 1]} : vector<4x6xf32> to vector<4x1xf32>
    %49 = vector.extract_strided_slice %6 {offsets = [0, 5], sizes = [4, 1], strides = [1, 1]} : vector<4x6xf32> to vector<4x1xf32>
    %50 = arith.addf %48, %49 : vector<4x1xf32>
    %cst_14 = arith.constant 5.000000e-01 : f32
    %51 = vector.broadcast %cst_14 : f32 to vector<4x1xf32>
    %52 = arith.mulf %50, %51 : vector<4x1xf32>
    %53 = vector.extract_strided_slice %7 {offsets = [0, 2], sizes = [4, 1], strides = [1, 1]} : vector<4x6xf32> to vector<4x1xf32>
    %54 = vector.extract_strided_slice %7 {offsets = [0, 5], sizes = [4, 1], strides = [1, 1]} : vector<4x6xf32> to vector<4x1xf32>
    %55 = arith.addf %53, %54 : vector<4x1xf32>
    %cst_15 = arith.constant 5.000000e-01 : f32
    %56 = vector.broadcast %cst_15 : f32 to vector<4x1xf32>
    %57 = arith.mulf %55, %56 : vector<4x1xf32>
    %58 = arith.subf %52, %57 : vector<4x1xf32>
    %59 = arith.mulf %36, %36 : vector<4x1xf32>
    %60 = arith.mulf %47, %47 : vector<4x1xf32>
    %61 = arith.addf %59, %60 : vector<4x1xf32>
    %62 = arith.mulf %58, %58 : vector<4x1xf32>
    %63 = arith.addf %61, %62 : vector<4x1xf32>
    %64 = math.sqrt %63 : vector<4x1xf32>
    %c0_16 = arith.constant 0 : index
    %c0_17 = arith.constant 0 : index
    %65 = vector.load %arg7[%c0_16, %c0_17] : memref<1x100xf32, #tpu.memory_space<vmem>>, vector<1x100xf32>
    %c0_18 = arith.constant 0 : index
    %c0_19 = arith.constant 0 : index
    %66 = vector.load %arg6[%c0_18, %c0_19] : memref<7x100xf32, #tpu.memory_space<vmem>>, vector<1x100xf32>
    %67 = vector.broadcast %19 : vector<4x1xf32> to vector<4x100xf32>
    %68 = vector.broadcast %66 : vector<1x100xf32> to vector<4x100xf32>
    %69 = arith.mulf %67, %68 : vector<4x100xf32>
    %70 = vector.broadcast %65 : vector<1x100xf32> to vector<4x100xf32>
    %71 = arith.addf %70, %69 : vector<4x100xf32>
    %c1 = arith.constant 1 : index
    %c0_20 = arith.constant 0 : index
    %72 = vector.load %arg6[%c1, %c0_20] : memref<7x100xf32, #tpu.memory_space<vmem>>, vector<1x100xf32>
    %73 = vector.broadcast %22 : vector<4x1xf32> to vector<4x100xf32>
    %74 = vector.broadcast %72 : vector<1x100xf32> to vector<4x100xf32>
    %75 = arith.mulf %73, %74 : vector<4x100xf32>
    %76 = arith.addf %71, %75 : vector<4x100xf32>
    %c2 = arith.constant 2 : index
    %c0_21 = arith.constant 0 : index
    %77 = vector.load %arg6[%c2, %c0_21] : memref<7x100xf32, #tpu.memory_space<vmem>>, vector<1x100xf32>
    %78 = vector.broadcast %25 : vector<4x1xf32> to vector<4x100xf32>
    %79 = vector.broadcast %77 : vector<1x100xf32> to vector<4x100xf32>
    %80 = arith.mulf %78, %79 : vector<4x100xf32>
    %81 = arith.addf %76, %80 : vector<4x100xf32>
    %c3 = arith.constant 3 : index
    %c0_22 = arith.constant 0 : index
    %82 = vector.load %arg6[%c3, %c0_22] : memref<7x100xf32, #tpu.memory_space<vmem>>, vector<1x100xf32>
    %83 = vector.broadcast %64 : vector<4x1xf32> to vector<4x100xf32>
    %84 = vector.broadcast %82 : vector<1x100xf32> to vector<4x100xf32>
    %85 = arith.mulf %83, %84 : vector<4x100xf32>
    %86 = arith.addf %81, %85 : vector<4x100xf32>
    %87 = tpu.concatenate %16, %86 in 1 : vector<4x32xf32>, vector<4x100xf32> -> vector<4x132xf32>
    %88 = arith.truncf %87 : vector<4x132xf32> to vector<4x132xbf16>
    %c0_23 = arith.constant 0 : index
    %c0_24 = arith.constant 0 : index
    %89 = vector.load %arg8[%c0_23, %c0_24] : memref<132x1000xbf16, #tpu.memory_space<vmem>>, vector<132x1000xbf16>
    %cst_25 = arith.constant dense<0.000000e+00> : vector<4x1000xf32>
    %90 = tpu.matmul %88, %89, %cst_25 {dimension_numbers = #tpu.dot_dimension_numbers<[1], [0], [0], [1], [0, 0, 1, 1], [], []>} : vector<4x132xbf16>, vector<132x1000xbf16>, vector<4x1000xf32> -> vector<4x1000xf32>
    %c0_26 = arith.constant 0 : index
    %c0_27 = arith.constant 0 : index
    %91 = vector.load %arg9[%c0_26, %c0_27] : memref<1x1000xf32, #tpu.memory_space<vmem>>, vector<1x1000xf32>
    %92 = vector.broadcast %91 : vector<1x1000xf32> to vector<4x1000xf32>
    %93 = arith.addf %90, %92 : vector<4x1000xf32>
    %94 = math.tanh %93 : vector<4x1000xf32>
    %95 = vector.extract_strided_slice %6 {offsets = [0, 0], sizes = [4, 3], strides = [1, 1]} : vector<4x6xf32> to vector<4x3xf32>
    %96 = vector.extract_strided_slice %7 {offsets = [0, 0], sizes = [4, 3], strides = [1, 1]} : vector<4x6xf32> to vector<4x3xf32>
    %97 = arith.maximumf %95, %96 : vector<4x3xf32>
    %98 = vector.extract_strided_slice %6 {offsets = [0, 3], sizes = [4, 3], strides = [1, 1]} : vector<4x6xf32> to vector<4x3xf32>
    %99 = vector.extract_strided_slice %7 {offsets = [0, 3], sizes = [4, 3], strides = [1, 1]} : vector<4x6xf32> to vector<4x3xf32>
    %100 = arith.minimumf %98, %99 : vector<4x3xf32>
    %101 = tpu.concatenate %97, %100 in 1 : vector<4x3xf32>, vector<4x3xf32> -> vector<4x6xf32>
    %c0_28 = arith.constant 0 : index
    %c0_29 = arith.constant 0 : index
    %102 = vector.load %arg10[%c0_28, %c0_29] : memref<4x1006xf32, #tpu.memory_space<vmem>>, vector<4x1000xf32>
    tpu.vector_store %arg10[%c0_28, %c0_29], %94 {strides = array<i32>} : memref<4x1006xf32, #tpu.memory_space<vmem>>, vector<4x1000xf32>,
    %c0_30 = arith.constant 0 : index
    %c1000 = arith.constant 1000 : index
    %103 = vector.load %arg10[%c0_30, %c1000] : memref<4x1006xf32, #tpu.memory_space<vmem>>, vector<4x6xf32>
    tpu.vector_store %arg10[%c0_30, %c1000], %101 {strides = array<i32>} : memref<4x1006xf32, #tpu.memory_space<vmem>>, vector<4x6xf32>,
    return
  }
  func.func @transform_0(%arg0: i32) -> (i32, i32) {
    %c0_i32 = arith.constant 0 : i32
    %c0_i32_0 = arith.constant 0 : i32
    return %arg0, %c0_i32 : i32, i32
  }
  func.func @transform_1(%arg0: i32) -> (i32, i32) {
    %c0_i32 = arith.constant 0 : i32
    %c0_i32_0 = arith.constant 0 : i32
    return %arg0, %c0_i32 : i32, i32
  }
  func.func @transform_2(%arg0: i32) -> (i32, i32) {
    %c0_i32 = arith.constant 0 : i32
    %c0_i32_0 = arith.constant 0 : i32
    %c0_i32_1 = arith.constant 0 : i32
    return %c0_i32, %c0_i32_0 : i32, i32
  }
  func.func @transform_3(%arg0: i32) -> (i32, i32) {
    %c0_i32 = arith.constant 0 : i32
    %c0_i32_0 = arith.constant 0 : i32
    %c0_i32_1 = arith.constant 0 : i32
    return %c0_i32, %c0_i32_0 : i32, i32
  }
  func.func @transform_4(%arg0: i32) -> (i32, i32) {
    %c0_i32 = arith.constant 0 : i32
    %c0_i32_0 = arith.constant 0 : i32
    %c0_i32_1 = arith.constant 0 : i32
    return %c0_i32, %c0_i32_0 : i32, i32
  }
  func.func @transform_5(%arg0: i32) -> (i32, i32) {
    %c0_i32 = arith.constant 0 : i32
    %c0_i32_0 = arith.constant 0 : i32
    %c0_i32_1 = arith.constant 0 : i32
    return %c0_i32, %c0_i32_0 : i32, i32
  }
  func.func @transform_6(%arg0: i32) -> (i32, i32) {
    %c0_i32 = arith.constant 0 : i32
    %c0_i32_0 = arith.constant 0 : i32
    %c0_i32_1 = arith.constant 0 : i32
    return %c0_i32, %c0_i32_0 : i32, i32
  }
  func.func @transform_7(%arg0: i32) -> (i32, i32) {
    %c0_i32 = arith.constant 0 : i32
    %c0_i32_0 = arith.constant 0 : i32
    %c0_i32_1 = arith.constant 0 : i32
    return %c0_i32, %c0_i32_0 : i32, i32
  }
  func.func @transform_8(%arg0: i32) -> (i32, i32) {
    %c0_i32 = arith.constant 0 : i32
    %c0_i32_0 = arith.constant 0 : i32
    %c0_i32_1 = arith.constant 0 : i32
    return %c0_i32, %c0_i32_0 : i32, i32
  }
  func.func @transform_9(%arg0: i32) -> (i32, i32) {
    %c0_i32 = arith.constant 0 : i32
    %c0_i32_0 = arith.constant 0 : i32
    return %arg0, %c0_i32 : i32, i32
  }
}

</mosaic_0001>

<llo_original>
// kernel: tpu_custom_call.1
$region0: #{tpu_custom_call.1}
  #allocation0 [shape = 'u32[]', space=smem, size = 0x4, offset = 0x4, fixed_abs, tag = 'smem constant byte address 0x4 - core index']
  #allocation1 [shape = 'u32[144,128]{1,0:T(1,128)}', space=vmem, size = 0x12000, scoped, tag = 'internal scratch']
  %s0 = inlined_call_operand.vmem [shape: f32[4,1006], index: 0, kind: input, shape index: {}]
  %s1 = inlined_call_operand.vmem [shape: f32[4,1006], index: 1, kind: input, shape index: {}]
  %s2 = inlined_call_operand.vmem [shape: bf16[1000,32], index: 2, kind: input, shape index: {}]
  %s3 = inlined_call_operand.vmem [shape: f32[1,32], index: 3, kind: input, shape index: {}]
  %s4 = inlined_call_operand.vmem [shape: bf16[1000,32], index: 4, kind: input, shape index: {}]
  %s5 = inlined_call_operand.vmem [shape: f32[7,100], index: 5, kind: input, shape index: {}]
  %s6 = inlined_call_operand.vmem [shape: f32[1,100], index: 6, kind: input, shape index: {}]
  %s7 = inlined_call_operand.vmem [shape: bf16[132,1000], index: 7, kind: input, shape index: {}]
  %s8 = inlined_call_operand.vmem [shape: f32[1,1000], index: 8, kind: input, shape index: {}]
  %s9 = inlined_call_operand.hbm [shape: f32[4,1006], index: 9, kind: output, shape index: {}]
  %s10 = sld [smem:[#allocation0]]
  $region46: #{tpu_custom_call.1} parent=0
    _
  %s12 = ssub.s32 1, %s10
  %s13 = scalar_select 0, %s12, %s10
  $region1: #{tpu_custom_call.1} parent=0
    #allocation2 [shape = 'u8[16384]{0}', space=vmem, size = 0x4000, scoped, tag = 'output window, operand 0, single buffered']
    #allocation3 [shape = 's32[1]{0}', space=sflag, size = 0x4, scoped, tag = 'scoped memory for tpu_custom_call.1']
    %14 = vsyncpa [#allocation3], 0
    // Predicated region
    $region2: #{tpu_custom_call.1} parent=1 // pred_check
      _
    $region3: #{tpu_custom_call.1} parent=1 // pred_check_branch
      %16 = sbr.rel (0) target = $region5
    $region4: #{tpu_custom_call.1} parent=1 // pred_region
      _
    $region5: #{tpu_custom_call.1} parent=1 // pred_fallthru
      _
    // Predicated region
    $region6: #{tpu_custom_call.1} parent=1 // pred_check
      _
    $region7: #{tpu_custom_call.1} parent=1 // pred_check_branch
      %18 = sbr.rel (0) target = $region9
    $region8: #{tpu_custom_call.1} parent=1 // pred_region
      _
    $region9: #{tpu_custom_call.1} parent=1 // pred_fallthru
      _
    // Predicated region
    $region10: #{tpu_custom_call.1} parent=1 // pred_check
      _
    $region11: #{tpu_custom_call.1} parent=1 // pred_check_branch
      %20 = sbr.rel (0) target = $region13
    $region12: #{tpu_custom_call.1} parent=1 // pred_region
      _
    $region13: #{tpu_custom_call.1} parent=1 // pred_fallthru
      _
    // Predicated region
    $region14: #{tpu_custom_call.1} parent=1 // pred_check
      _
    $region15: #{tpu_custom_call.1} parent=1 // pred_check_branch
      %22 = sbr.rel (0) target = $region17
    $region16: #{tpu_custom_call.1} parent=1 // pred_region
      _
    $region17: #{tpu_custom_call.1} parent=1 // pred_fallthru
      _
    // Predicated region
    $region18: #{tpu_custom_call.1} parent=1 // pred_check
      _
    $region19: #{tpu_custom_call.1} parent=1 // pred_check_branch
      %24 = sbr.rel (0) target = $region21
    $region20: #{tpu_custom_call.1} parent=1 // pred_region
      _
    $region21: #{tpu_custom_call.1} parent=1 // pred_fallthru
      _
    // Predicated region
    $region22: #{tpu_custom_call.1} parent=1 // pred_check
      _
    $region23: #{tpu_custom_call.1} parent=1 // pred_check_branch
      %26 = sbr.rel (0) target = $region25
    $region24: #{tpu_custom_call.1} parent=1 // pred_region
      _
    $region25: #{tpu_custom_call.1} parent=1 // pred_fallthru
      _
    // Predicated region
    $region26: #{tpu_custom_call.1} parent=1 // pred_check
      _
    $region27: #{tpu_custom_call.1} parent=1 // pred_check_branch
      %28 = sbr.rel (0) target = $region29
    $region28: #{tpu_custom_call.1} parent=1 // pred_region
      _
    $region29: #{tpu_custom_call.1} parent=1 // pred_fallthru
      _
    // Predicated region
    $region30: #{tpu_custom_call.1} parent=1 // pred_check
      _
    $region31: #{tpu_custom_call.1} parent=1 // pred_check_branch
      %30 = sbr.rel (0) target = $region33
    $region32: #{tpu_custom_call.1} parent=1 // pred_region
      _
    $region33: #{tpu_custom_call.1} parent=1 // pred_fallthru
      _
    // Predicated region
    $region34: #{tpu_custom_call.1} parent=1 // pred_check
      _
    $region35: #{tpu_custom_call.1} parent=1 // pred_check_branch
      %32 = sbr.rel (0) target = $region37
    $region36: #{tpu_custom_call.1} parent=1 // pred_region
      _
    $region37: #{tpu_custom_call.1} parent=1 // pred_fallthru
      _
    %v34 = vld [vmem:[%s0] sm:$0xff]
    %v35 = vld [vmem:[%s0 + $0x8] sm:$0xff]
    %v36 = vld [vmem:[%s0 + $0x10] sm:$0xff]
    %v37 = vld [vmem:[%s0 + $0x18] sm:$0xff]
    %v38 = vld [vmem:[%s1] sm:$0xff]
    %v39 = vld [vmem:[%s1 + $0x8] sm:$0xff]
    %v40 = vld [vmem:[%s1 + $0x10] sm:$0xff]
    %v41 = vld [vmem:[%s1 + $0x18] sm:$0xff]
    %v46 = vcombine.high %v34, %v34
    %v47 = vcombine.high %v35, %v35
    %v48 = vcombine.high %v36, %v36
    %v49 = vcombine.high %v37, %v37
    %v54 = vpack.c.bf16 %v34, %v34
    %v55 = vpack.c.bf16 %v46, %v46
    %v56 = vpack.c.bf16 %v35, %v35
    %v57 = vpack.c.bf16 %v47, %v47
    %v58 = vpack.c.bf16 %v36, %v36
    %v59 = vpack.c.bf16 %v48, %v48
    %v60 = vpack.c.bf16 %v37, %v37
    %v61 = vpack.c.bf16 %v49, %v49
    %v66 = vcombine.high %v38, %v38
    %v67 = vcombine.high %v39, %v39
    %v68 = vcombine.high %v40, %v40
    %v69 = vcombine.high %v41, %v41
    %v74 = vpack.c.bf16 %v38, %v38
    %v75 = vpack.c.bf16 %v66, %v66
    %v76 = vpack.c.bf16 %v39, %v39
    %v77 = vpack.c.bf16 %v67, %v67
    %v78 = vpack.c.bf16 %v40, %v40
    %v79 = vpack.c.bf16 %v68, %v68
    %v80 = vpack.c.bf16 %v41, %v41
    %v81 = vpack.c.bf16 %v69, %v69
    %v82 = vld [vmem:[%s2] sm:$0xf]
    %v83 = vld [vmem:[%s2 + $0x4] sm:$0xf]
    %v84 = vld [vmem:[%s2 + $0x8] sm:$0xf]
    %v85 = vld [vmem:[%s2 + $0xc] sm:$0xf]
    %v86 = vld [vmem:[%s2 + $0x10] sm:$0xf]
    %v87 = vld [vmem:[%s2 + $0x14] sm:$0xf]
    %v88 = vld [vmem:[%s2 + $0x18] sm:$0xf]
    %v89 = vld [vmem:[%s2 + $0x1c] sm:$0xf]
    %v90 = vld [vmem:[%s2 + $0x20] sm:$0xf]
    %v91 = vld [vmem:[%s2 + $0x24] sm:$0xf]
    %v92 = vld [vmem:[%s2 + $0x28] sm:$0xf]
    %v93 = vld [vmem:[%s2 + $0x2c] sm:$0xf]
    %v94 = vld [vmem:[%s2 + $0x30] sm:$0xf]
    %v95 = vld [vmem:[%s2 + $0x34] sm:$0xf]
    %v96 = vld [vmem:[%s2 + $0x38] sm:$0xf]
    %v97 = vld [vmem:[%s2 + $0x3c] sm:$0xf]
    %v98 = vld [vmem:[%s2 + $0x40] sm:$0xf]
    %v99 = vld [vmem:[%s2 + $0x44] sm:$0xf]
    %v100 = vld [vmem:[%s2 + $0x48] sm:$0xf]
    %v101 = vld [vmem:[%s2 + $0x4c] sm:$0xf]
    %v102 = vld [vmem:[%s2 + $0x50] sm:$0xf]
    %v103 = vld [vmem:[%s2 + $0x54] sm:$0xf]
    %v104 = vld [vmem:[%s2 + $0x58] sm:$0xf]
    %v105 = vld [vmem:[%s2 + $0x5c] sm:$0xf]
    %v106 = vld [vmem:[%s2 + $0x60] sm:$0xf]
    %v107 = vld [vmem:[%s2 + $0x64] sm:$0xf]
    %v108 = vld [vmem:[%s2 + $0x68] sm:$0xf]
    %v109 = vld [vmem:[%s2 + $0x6c] sm:$0xf]
    %v110 = vld [vmem:[%s2 + $0x70] sm:$0xf]
    %v111 = vld [vmem:[%s2 + $0x74] sm:$0xf]
    %v112 = vld [vmem:[%s2 + $0x78] sm:$0xf]
    %v113 = vld [vmem:[%s2 + $0x7c] sm:$0xf]
    %v114 = vld [vmem:[%s2 + $0x80] sm:$0xf]
    %v115 = vld [vmem:[%s2 + $0x84] sm:$0xf]
    %v116 = vld [vmem:[%s2 + $0x88] sm:$0xf]
    %v117 = vld [vmem:[%s2 + $0x8c] sm:$0xf]
    %v118 = vld [vmem:[%s2 + $0x90] sm:$0xf]
    %v119 = vld [vmem:[%s2 + $0x94] sm:$0xf]
    %v120 = vld [vmem:[%s2 + $0x98] sm:$0xf]
    %v121 = vld [vmem:[%s2 + $0x9c] sm:$0xf]
    %v122 = vld [vmem:[%s2 + $0xa0] sm:$0xf]
    %v123 = vld [vmem:[%s2 + $0xa4] sm:$0xf]
    %v124 = vld [vmem:[%s2 + $0xa8] sm:$0xf]
    %v125 = vld [vmem:[%s2 + $0xac] sm:$0xf]
    %v126 = vld [vmem:[%s2 + $0xb0] sm:$0xf]
    %v127 = vld [vmem:[%s2 + $0xb4] sm:$0xf]
    %v128 = vld [vmem:[%s2 + $0xb8] sm:$0xf]
    %v129 = vld [vmem:[%s2 + $0xbc] sm:$0xf]
    %v130 = vld [vmem:[%s2 + $0xc0] sm:$0xf]
    %v131 = vld [vmem:[%s2 + $0xc4] sm:$0xf]
    %v132 = vld [vmem:[%s2 + $0xc8] sm:$0xf]
    %v133 = vld [vmem:[%s2 + $0xcc] sm:$0xf]
    %v134 = vld [vmem:[%s2 + $0xd0] sm:$0xf]
    %v135 = vld [vmem:[%s2 + $0xd4] sm:$0xf]
    %v136 = vld [vmem:[%s2 + $0xd8] sm:$0xf]
    %v137 = vld [vmem:[%s2 + $0xdc] sm:$0xf]
    %v138 = vld [vmem:[%s2 + $0xe0] sm:$0xf]
    %v139 = vld [vmem:[%s2 + $0xe4] sm:$0xf]
    %v140 = vld [vmem:[%s2 + $0xe8] sm:$0xf]
    %v141 = vld [vmem:[%s2 + $0xec] sm:$0xf]
    %v142 = vld [vmem:[%s2 + $0xf0] sm:$0xf]
    %v143 = vld [vmem:[%s2 + $0xf4] sm:$0xf]
    %v144 = vld [vmem:[%s2 + $0xf8] sm:$0xf]
    %v145 = vld [vmem:[%s2 + $0xfc] sm:$0xf]
    %v146 = vld [vmem:[%s2 + $0x100] sm:$0xf]
    %v147 = vld [vmem:[%s2 + $0x104] sm:$0xf]
    %v148 = vld [vmem:[%s2 + $0x108] sm:$0xf]
    %v149 = vld [vmem:[%s2 + $0x10c] sm:$0xf]
    %v150 = vld [vmem:[%s2 + $0x110] sm:$0xf]
    %v151 = vld [vmem:[%s2 + $0x114] sm:$0xf]
    %v152 = vld [vmem:[%s2 + $0x118] sm:$0xf]
    %v153 = vld [vmem:[%s2 + $0x11c] sm:$0xf]
    %v154 = vld [vmem:[%s2 + $0x120] sm:$0xf]
    %v155 = vld [vmem:[%s2 + $0x124] sm:$0xf]
    %v156 = vld [vmem:[%s2 + $0x128] sm:$0xf]
    %v157 = vld [vmem:[%s2 + $0x12c] sm:$0xf]
    %v158 = vld [vmem:[%s2 + $0x130] sm:$0xf]
    %v159 = vld [vmem:[%s2 + $0x134] sm:$0xf]
    %v160 = vld [vmem:[%s2 + $0x138] sm:$0xf]
    %v161 = vld [vmem:[%s2 + $0x13c] sm:$0xf]
    %v162 = vld [vmem:[%s2 + $0x140] sm:$0xf]
    %v163 = vld [vmem:[%s2 + $0x144] sm:$0xf]
    %v164 = vld [vmem:[%s2 + $0x148] sm:$0xf]
    %v165 = vld [vmem:[%s2 + $0x14c] sm:$0xf]
    %v166 = vld [vmem:[%s2 + $0x150] sm:$0xf]
    %v167 = vld [vmem:[%s2 + $0x154] sm:$0xf]
    %v168 = vld [vmem:[%s2 + $0x158] sm:$0xf]
    %v169 = vld [vmem:[%s2 + $0x15c] sm:$0xf]
    %v170 = vld [vmem:[%s2 + $0x160] sm:$0xf]
    %v171 = vld [vmem:[%s2 + $0x164] sm:$0xf]
    %v172 = vld [vmem:[%s2 + $0x168] sm:$0xf]
    %v173 = vld [vmem:[%s2 + $0x16c] sm:$0xf]
    %v174 = vld [vmem:[%s2 + $0x170] sm:$0xf]
    %v175 = vld [vmem:[%s2 + $0x174] sm:$0xf]
    %v176 = vld [vmem:[%s2 + $0x178] sm:$0xf]
    %v177 = vld [vmem:[%s2 + $0x17c] sm:$0xf]
    %v178 = vld [vmem:[%s2 + $0x180] sm:$0xf]
    %v179 = vld [vmem:[%s2 + $0x184] sm:$0xf]
    %v180 = vld [vmem:[%s2 + $0x188] sm:$0xf]
    %v181 = vld [vmem:[%s2 + $0x18c] sm:$0xf]
    %v182 = vld [vmem:[%s2 + $0x190] sm:$0xf]
    %v183 = vld [vmem:[%s2 + $0x194] sm:$0xf]
    %v184 = vld [vmem:[%s2 + $0x198] sm:$0xf]
    %v185 = vld [vmem:[%s2 + $0x19c] sm:$0xf]
    %v186 = vld [vmem:[%s2 + $0x1a0] sm:$0xf]
    %v187 = vld [vmem:[%s2 + $0x1a4] sm:$0xf]
    %v188 = vld [vmem:[%s2 + $0x1a8] sm:$0xf]
    %v189 = vld [vmem:[%s2 + $0x1ac] sm:$0xf]
    %v190 = vld [vmem:[%s2 + $0x1b0] sm:$0xf]
    %v191 = vld [vmem:[%s2 + $0x1b4] sm:$0xf]
    %v192 = vld [vmem:[%s2 + $0x1b8] sm:$0xf]
    %v193 = vld [vmem:[%s2 + $0x1bc] sm:$0xf]
    %v194 = vld [vmem:[%s2 + $0x1c0] sm:$0xf]
    %v195 = vld [vmem:[%s2 + $0x1c4] sm:$0xf]
    %v196 = vld [vmem:[%s2 + $0x1c8] sm:$0xf]
    %v197 = vld [vmem:[%s2 + $0x1cc] sm:$0xf]
    %v198 = vld [vmem:[%s2 + $0x1d0] sm:$0xf]
    %v199 = vld [vmem:[%s2 + $0x1d4] sm:$0xf]
    %v200 = vld [vmem:[%s2 + $0x1d8] sm:$0xf]
    %v201 = vld [vmem:[%s2 + $0x1dc] sm:$0xf]
    %v202 = vld [vmem:[%s2 + $0x1e0] sm:$0xf]
    %v203 = vld [vmem:[%s2 + $0x1e4] sm:$0xf]
    %v204 = vld [vmem:[%s2 + $0x1e8] sm:$0xf]
    %v205 = vld [vmem:[%s2 + $0x1ec] sm:$0xf]
    %v206 = vld [vmem:[%s2 + $0x1f0] sm:$0xf]
    %v207 = vld [vmem:[%s4] sm:$0xf]
    %v208 = vld [vmem:[%s4 + $0x4] sm:$0xf]
    %v209 = vld [vmem:[%s4 + $0x8] sm:$0xf]
    %v210 = vld [vmem:[%s4 + $0xc] sm:$0xf]
    %v211 = vld [vmem:[%s4 + $0x10] sm:$0xf]
    %v212 = vld [vmem:[%s4 + $0x14] sm:$0xf]
    %v213 = vld [vmem:[%s4 + $0x18] sm:$0xf]
    %v214 = vld [vmem:[%s4 + $0x1c] sm:$0xf]
    %v215 = vld [vmem:[%s4 + $0x20] sm:$0xf]
    %v216 = vld [vmem:[%s4 + $0x24] sm:$0xf]
    %v217 = vld [vmem:[%s4 + $0x28] sm:$0xf]
    %v218 = vld [vmem:[%s4 + $0x2c] sm:$0xf]
    %v219 = vld [vmem:[%s4 + $0x30] sm:$0xf]
    %v220 = vld [vmem:[%s4 + $0x34] sm:$0xf]
    %v221 = vld [vmem:[%s4 + $0x38] sm:$0xf]
    %v222 = vld [vmem:[%s4 + $0x3c] sm:$0xf]
    %v223 = vld [vmem:[%s4 + $0x40] sm:$0xf]
    %v224 = vld [vmem:[%s4 + $0x44] sm:$0xf]
    %v225 = vld [vmem:[%s4 + $0x48] sm:$0xf]
    %v226 = vld [vmem:[%s4 + $0x4c] sm:$0xf]
    %v227 = vld [vmem:[%s4 + $0x50] sm:$0xf]
    %v228 = vld [vmem:[%s4 + $0x54] sm:$0xf]
    %v229 = vld [vmem:[%s4 + $0x58] sm:$0xf]
    %v230 = vld [vmem:[%s4 + $0x5c] sm:$0xf]
    %v231 = vld [vmem:[%s4 + $0x60] sm:$0xf]
    %v232 = vld [vmem:[%s4 + $0x64] sm:$0xf]
    %v233 = vld [vmem:[%s4 + $0x68] sm:$0xf]
    %v234 = vld [vmem:[%s4 + $0x6c] sm:$0xf]
    %v235 = vld [vmem:[%s4 + $0x70] sm:$0xf]
    %v236 = vld [vmem:[%s4 + $0x74] sm:$0xf]
    %v237 = vld [vmem:[%s4 + $0x78] sm:$0xf]
    %v238 = vld [vmem:[%s4 + $0x7c] sm:$0xf]
    %v239 = vld [vmem:[%s4 + $0x80] sm:$0xf]
    %v240 = vld [vmem:[%s4 + $0x84] sm:$0xf]
    %v241 = vld [vmem:[%s4 + $0x88] sm:$0xf]
    %v242 = vld [vmem:[%s4 + $0x8c] sm:$0xf]
    %v243 = vld [vmem:[%s4 + $0x90] sm:$0xf]
    %v244 = vld [vmem:[%s4 + $0x94] sm:$0xf]
    %v245 = vld [vmem:[%s4 + $0x98] sm:$0xf]
    %v246 = vld [vmem:[%s4 + $0x9c] sm:$0xf]
    %v247 = vld [vmem:[%s4 + $0xa0] sm:$0xf]
    %v248 = vld [vmem:[%s4 + $0xa4] sm:$0xf]
    %v249 = vld [vmem:[%s4 + $0xa8] sm:$0xf]
    %v250 = vld [vmem:[%s4 + $0xac] sm:$0xf]
    %v251 = vld [vmem:[%s4 + $0xb0] sm:$0xf]
    %v252 = vld [vmem:[%s4 + $0xb4] sm:$0xf]
    %v253 = vld [vmem:[%s4 + $0xb8] sm:$0xf]
    %v254 = vld [vmem:[%s4 + $0xbc] sm:$0xf]
    %v255 = vld [vmem:[%s4 + $0xc0] sm:$0xf]
    %v256 = vld [vmem:[%s4 + $0xc4] sm:$0xf]
    %v257 = vld [vmem:[%s4 + $0xc8] sm:$0xf]
    %v258 = vld [vmem:[%s4 + $0xcc] sm:$0xf]
    %v259 = vld [vmem:[%s4 + $0xd0] sm:$0xf]
    %v260 = vld [vmem:[%s4 + $0xd4] sm:$0xf]
    %v261 = vld [vmem:[%s4 + $0xd8] sm:$0xf]
    %v262 = vld [vmem:[%s4 + $0xdc] sm:$0xf]
    %v263 = vld [vmem:[%s4 + $0xe0] sm:$0xf]
    %v264 = vld [vmem:[%s4 + $0xe4] sm:$0xf]
    %v265 = vld [vmem:[%s4 + $0xe8] sm:$0xf]
    %v266 = vld [vmem:[%s4 + $0xec] sm:$0xf]
    %v267 = vld [vmem:[%s4 + $0xf0] sm:$0xf]
    %v268 = vld [vmem:[%s4 + $0xf4] sm:$0xf]
    %v269 = vld [vmem:[%s4 + $0xf8] sm:$0xf]
    %v270 = vld [vmem:[%s4 + $0xfc] sm:$0xf]
    %v271 = vld [vmem:[%s4 + $0x100] sm:$0xf]
    %v272 = vld [vmem:[%s4 + $0x104] sm:$0xf]
    %v273 = vld [vmem:[%s4 + $0x108] sm:$0xf]
    %v274 = vld [vmem:[%s4 + $0x10c] sm:$0xf]
    %v275 = vld [vmem:[%s4 + $0x110] sm:$0xf]
    %v276 = vld [vmem:[%s4 + $0x114] sm:$0xf]
    %v277 = vld [vmem:[%s4 + $0x118] sm:$0xf]
    %v278 = vld [vmem:[%s4 + $0x11c] sm:$0xf]
    %v279 = vld [vmem:[%s4 + $0x120] sm:$0xf]
    %v280 = vld [vmem:[%s4 + $0x124] sm:$0xf]
    %v281 = vld [vmem:[%s4 + $0x128] sm:$0xf]
    %v282 = vld [vmem:[%s4 + $0x12c] sm:$0xf]
    %v283 = vld [vmem:[%s4 + $0x130] sm:$0xf]
    %v284 = vld [vmem:[%s4 + $0x134] sm:$0xf]
    %v285 = vld [vmem:[%s4 + $0x138] sm:$0xf]
    %v286 = vld [vmem:[%s4 + $0x13c] sm:$0xf]
    %v287 = vld [vmem:[%s4 + $0x140] sm:$0xf]
    %v288 = vld [vmem:[%s4 + $0x144] sm:$0xf]
    %v289 = vld [vmem:[%s4 + $0x148] sm:$0xf]
    %v290 = vld [vmem:[%s4 + $0x14c] sm:$0xf]
    %v291 = vld [vmem:[%s4 + $0x150] sm:$0xf]
    %v292 = vld [vmem:[%s4 + $0x154] sm:$0xf]
    %v293 = vld [vmem:[%s4 + $0x158] sm:$0xf]
    %v294 = vld [vmem:[%s4 + $0x15c] sm:$0xf]
    %v295 = vld [vmem:[%s4 + $0x160] sm:$0xf]
    %v296 = vld [vmem:[%s4 + $0x164] sm:$0xf]
    %v297 = vld [vmem:[%s4 + $0x168] sm:$0xf]
    %v298 = vld [vmem:[%s4 + $0x16c] sm:$0xf]
    %v299 = vld [vmem:[%s4 + $0x170] sm:$0xf]
    %v300 = vld [vmem:[%s4 + $0x174] sm:$0xf]
    %v301 = vld [vmem:[%s4 + $0x178] sm:$0xf]
    %v302 = vld [vmem:[%s4 + $0x17c] sm:$0xf]
    %v303 = vld [vmem:[%s4 + $0x180] sm:$0xf]
    %v304 = vld [vmem:[%s4 + $0x184] sm:$0xf]
    %v305 = vld [vmem:[%s4 + $0x188] sm:$0xf]
    %v306 = vld [vmem:[%s4 + $0x18c] sm:$0xf]
    %v307 = vld [vmem:[%s4 + $0x190] sm:$0xf]
    %v308 = vld [vmem:[%s4 + $0x194] sm:$0xf]
    %v309 = vld [vmem:[%s4 + $0x198] sm:$0xf]
    %v310 = vld [vmem:[%s4 + $0x19c] sm:$0xf]
    %v311 = vld [vmem:[%s4 + $0x1a0] sm:$0xf]
    %v312 = vld [vmem:[%s4 + $0x1a4] sm:$0xf]
    %v313 = vld [vmem:[%s4 + $0x1a8] sm:$0xf]
    %v314 = vld [vmem:[%s4 + $0x1ac] sm:$0xf]
    %v315 = vld [vmem:[%s4 + $0x1b0] sm:$0xf]
    %v316 = vld [vmem:[%s4 + $0x1b4] sm:$0xf]
    %v317 = vld [vmem:[%s4 + $0x1b8] sm:$0xf]
    %v318 = vld [vmem:[%s4 + $0x1bc] sm:$0xf]
    %v319 = vld [vmem:[%s4 + $0x1c0] sm:$0xf]
    %v320 = vld [vmem:[%s4 + $0x1c4] sm:$0xf]
    %v321 = vld [vmem:[%s4 + $0x1c8] sm:$0xf]
    %v322 = vld [vmem:[%s4 + $0x1cc] sm:$0xf]
    %v323 = vld [vmem:[%s4 + $0x1d0] sm:$0xf]
    %v324 = vld [vmem:[%s4 + $0x1d4] sm:$0xf]
    %v325 = vld [vmem:[%s4 + $0x1d8] sm:$0xf]
    %v326 = vld [vmem:[%s4 + $0x1dc] sm:$0xf]
    %v327 = vld [vmem:[%s4 + $0x1e0] sm:$0xf]
    %v328 = vld [vmem:[%s4 + $0x1e4] sm:$0xf]
    %v329 = vld [vmem:[%s4 + $0x1e8] sm:$0xf]
    %v330 = vld [vmem:[%s4 + $0x1ec] sm:$0xf]
    %v331 = vld [vmem:[%s4 + $0x1f0] sm:$0xf]
    %v457 = vunpack.c.l.b16 %v207
    %v458 = vunpack.c.l.b16 %v208
    %v459 = vunpack.c.l.b16 %v209
    %v460 = vunpack.c.l.b16 %v210
    %v461 = vunpack.c.l.b16 %v211
    %v462 = vunpack.c.l.b16 %v212
    %v463 = vunpack.c.l.b16 %v213
    %v464 = vunpack.c.l.b16 %v214
    %v465 = vunpack.c.l.b16 %v215
    %v466 = vunpack.c.l.b16 %v216
    %v467 = vunpack.c.l.b16 %v217
    %v468 = vunpack.c.l.b16 %v218
    %v469 = vunpack.c.l.b16 %v219
    %v470 = vunpack.c.l.b16 %v220
    %v471 = vunpack.c.l.b16 %v221
    %v472 = vunpack.c.l.b16 %v222
    %v473 = vunpack.c.l.b16 %v223
    %v474 = vunpack.c.l.b16 %v224
    %v475 = vunpack.c.l.b16 %v225
    %v476 = vunpack.c.l.b16 %v226
    %v477 = vunpack.c.l.b16 %v227
    %v478 = vunpack.c.l.b16 %v228
    %v479 = vunpack.c.l.b16 %v229
    %v480 = vunpack.c.l.b16 %v230
    %v481 = vunpack.c.l.b16 %v231
    %v482 = vunpack.c.l.b16 %v232
    %v483 = vunpack.c.l.b16 %v233
    %v484 = vunpack.c.l.b16 %v234
    %v485 = vunpack.c.l.b16 %v235
    %v486 = vunpack.c.l.b16 %v236
    %v487 = vunpack.c.l.b16 %v237
    %v488 = vunpack.c.l.b16 %v238
    %v489 = vunpack.c.l.b16 %v239
    %v490 = vunpack.c.l.b16 %v240
    %v491 = vunpack.c.l.b16 %v241
    %v492 = vunpack.c.l.b16 %v242
    %v493 = vunpack.c.l.b16 %v243
    %v494 = vunpack.c.l.b16 %v244
    %v495 = vunpack.c.l.b16 %v245
    %v496 = vunpack.c.l.b16 %v246
    %v497 = vunpack.c.l.b16 %v247
    %v498 = vunpack.c.l.b16 %v248
    %v499 = vunpack.c.l.b16 %v249
    %v500 = vunpack.c.l.b16 %v250
    %v501 = vunpack.c.l.b16 %v251
    %v502 = vunpack.c.l.b16 %v252
    %v503 = vunpack.c.l.b16 %v253
    %v504 = vunpack.c.l.b16 %v254
    %v505 = vunpack.c.l.b16 %v255
    %v506 = vunpack.c.l.b16 %v256
    %v507 = vunpack.c.l.b16 %v257
    %v508 = vunpack.c.l.b16 %v258
    %v509 = vunpack.c.l.b16 %v259
    %v510 = vunpack.c.l.b16 %v260
    %v511 = vunpack.c.l.b16 %v261
    %v512 = vunpack.c.l.b16 %v262
    %v513 = vunpack.c.l.b16 %v263
    %v514 = vunpack.c.l.b16 %v264
    %v515 = vunpack.c.l.b16 %v265
    %v516 = vunpack.c.l.b16 %v266
    %v517 = vunpack.c.l.b16 %v267
    %v518 = vunpack.c.l.b16 %v268
    %v519 = vunpack.c.l.b16 %v269
    %v520 = vunpack.c.l.b16 %v270
    %v521 = vunpack.c.l.b16 %v271
    %v522 = vunpack.c.l.b16 %v272
    %v523 = vunpack.c.l.b16 %v273
    %v524 = vunpack.c.l.b16 %v274
    %v525 = vunpack.c.l.b16 %v275
    %v526 = vunpack.c.l.b16 %v276
    %v527 = vunpack.c.l.b16 %v277
    %v528 = vunpack.c.l.b16 %v278
    %v529 = vunpack.c.l.b16 %v279
    %v530 = vunpack.c.l.b16 %v280
    %v531 = vunpack.c.l.b16 %v281
    %v532 = vunpack.c.l.b16 %v282
    %v533 = vunpack.c.l.b16 %v283
    %v534 = vunpack.c.l.b16 %v284
    %v535 = vunpack.c.l.b16 %v285
    %v536 = vunpack.c.l.b16 %v286
    %v537 = vunpack.c.l.b16 %v287
    %v538 = vunpack.c.l.b16 %v288
    %v539 = vunpack.c.l.b16 %v289
    %v540 = vunpack.c.l.b16 %v290
    %v541 = vunpack.c.l.b16 %v291
    %v542 = vunpack.c.l.b16 %v292
    %v543 = vunpack.c.l.b16 %v293
    %v544 = vunpack.c.l.b16 %v294
    %v545 = vunpack.c.l.b16 %v295
    %v546 = vunpack.c.l.b16 %v296
    %v547 = vunpack.c.l.b16 %v297
    %v548 = vunpack.c.l.b16 %v298
    %v549 = vunpack.c.l.b16 %v299
    %v550 = vunpack.c.l.b16 %v300
    %v551 = vunpack.c.l.b16 %v301
    %v552 = vunpack.c.l.b16 %v302
    %v553 = vunpack.c.l.b16 %v303
    %v554 = vunpack.c.l.b16 %v304
    %v555 = vunpack.c.l.b16 %v305
    %v556 = vunpack.c.l.b16 %v306
    %v557 = vunpack.c.l.b16 %v307
    %v558 = vunpack.c.l.b16 %v308
    %v559 = vunpack.c.l.b16 %v309
    %v560 = vunpack.c.l.b16 %v310
    %v561 = vunpack.c.l.b16 %v311
    %v562 = vunpack.c.l.b16 %v312
    %v563 = vunpack.c.l.b16 %v313
    %v564 = vunpack.c.l.b16 %v314
    %v565 = vunpack.c.l.b16 %v315
    %v566 = vunpack.c.l.b16 %v316
    %v567 = vunpack.c.l.b16 %v317
    %v568 = vunpack.c.l.b16 %v318
    %v569 = vunpack.c.l.b16 %v319
    %v570 = vunpack.c.l.b16 %v320
    %v571 = vunpack.c.l.b16 %v321
    %v572 = vunpack.c.l.b16 %v322
    %v573 = vunpack.c.l.b16 %v323
    %v574 = vunpack.c.l.b16 %v324
    %v575 = vunpack.c.l.b16 %v325
    %v576 = vunpack.c.l.b16 %v326
    %v577 = vunpack.c.l.b16 %v327
    %v578 = vunpack.c.l.b16 %v328
    %v579 = vunpack.c.l.b16 %v329
    %v580 = vunpack.c.l.b16 %v330
    %v581 = vunpack.c.l.b16 %v331
    %v582 = vpack.c.b16 %v458, %v457
    %v583 = vpack.c.b16 %v460, %v459
    %v584 = vpack.c.b16 %v462, %v461
    %v585 = vpack.c.b16 %v464, %v463
    %v586 = vpack.c.b16 %v466, %v465
    %v587 = vpack.c.b16 %v468, %v467
    %v588 = vpack.c.b16 %v470, %v469
    %v589 = vpack.c.b16 %v472, %v471
    %v590 = vpack.c.b16 %v474, %v473
    %v591 = vpack.c.b16 %v476, %v475
    %v592 = vpack.c.b16 %v478, %v477
    %v593 = vpack.c.b16 %v480, %v479
    %v594 = vpack.c.b16 %v482, %v481
    %v595 = vpack.c.b16 %v484, %v483
    %v596 = vpack.c.b16 %v486, %v485
    %v597 = vpack.c.b16 %v488, %v487
    %v598 = vpack.c.b16 %v490, %v489
    %v599 = vpack.c.b16 %v492, %v491
    %v600 = vpack.c.b16 %v494, %v493
    %v601 = vpack.c.b16 %v496, %v495
    %v602 = vpack.c.b16 %v498, %v497
    %v603 = vpack.c.b16 %v500, %v499
    %v604 = vpack.c.b16 %v502, %v501
    %v605 = vpack.c.b16 %v504, %v503
    %v606 = vpack.c.b16 %v506, %v505
    %v607 = vpack.c.b16 %v508, %v507
    %v608 = vpack.c.b16 %v510, %v509
    %v609 = vpack.c.b16 %v512, %v511
    %v610 = vpack.c.b16 %v514, %v513
    %v611 = vpack.c.b16 %v516, %v515
    %v612 = vpack.c.b16 %v518, %v517
    %v613 = vpack.c.b16 %v520, %v519
    %v614 = vpack.c.b16 %v522, %v521
    %v615 = vpack.c.b16 %v524, %v523
    %v616 = vpack.c.b16 %v526, %v525
    %v617 = vpack.c.b16 %v528, %v527
    %v618 = vpack.c.b16 %v530, %v529
    %v619 = vpack.c.b16 %v532, %v531
    %v620 = vpack.c.b16 %v534, %v533
    %v621 = vpack.c.b16 %v536, %v535
    %v622 = vpack.c.b16 %v538, %v537
    %v623 = vpack.c.b16 %v540, %v539
    %v624 = vpack.c.b16 %v542, %v541
    %v625 = vpack.c.b16 %v544, %v543
    %v626 = vpack.c.b16 %v546, %v545
    %v627 = vpack.c.b16 %v548, %v547
    %v628 = vpack.c.b16 %v550, %v549
    %v629 = vpack.c.b16 %v552, %v551
    %v630 = vpack.c.b16 %v554, %v553
    %v631 = vpack.c.b16 %v556, %v555
    %v632 = vpack.c.b16 %v558, %v557
    %v633 = vpack.c.b16 %v560, %v559
    %v634 = vpack.c.b16 %v562, %v561
    %v635 = vpack.c.b16 %v564, %v563
    %v636 = vpack.c.b16 %v566, %v565
    %v637 = vpack.c.b16 %v568, %v567
    %v638 = vpack.c.b16 %v570, %v569
    %v639 = vpack.c.b16 %v572, %v571
    %v640 = vpack.c.b16 %v574, %v573
    %v641 = vpack.c.b16 %v576, %v575
    %v642 = vpack.c.b16 %v578, %v577
    %v643 = vpack.c.b16 %v580, %v579
    %v644 = vpack.c.b16 %v581, %v581
    %vm707 = vcmask 850944
    %v709 = vsel %vm707, %v81, 0
    %vm711 = vcmask 1043456
    %v713 = vsel %vm711, %v644, 0
    %715 = vmatprep.subr.bf16.mxu0 0
    %716 = vmatpush1.bf16.msra.mxu0 %v582
    %717 = vmatprep.subr.bf16.mxu0 0
    %718 = vmatpush1.bf16.msra.mxu0 %v583
    %719 = vmatprep.subr.bf16.mxu0 0
    %720 = vmatpush1.bf16.msra.mxu0 %v584
    %721 = vmatprep.subr.bf16.mxu0 0
    %722 = vmatpush1.bf16.msra.mxu0 %v585
    %723 = vmatprep.subr.bf16.mxu0 0
    %724 = vmatpush1.bf16.msra.mxu0 %v586
    %725 = vmatprep.subr.bf16.mxu0 0
    %726 = vmatpush1.bf16.msra.mxu0 %v587
    %727 = vmatprep.subr.bf16.mxu0 0
    %728 = vmatpush1.bf16.msra.mxu0 %v588
    %729 = vmatprep.subr.bf16.mxu0 0
    %730 = vmatpush1.bf16.msra.mxu0 %v589
    %731 = vmatprep.subr.bf16.mxu0 0
    %732 = vmatpush1.bf16.msra.mxu0 %v590
    %733 = vmatprep.subr.bf16.mxu0 0
    %734 = vmatpush1.bf16.msra.mxu0 %v591
    %735 = vmatprep.subr.bf16.mxu0 0
    %736 = vmatpush1.bf16.msra.mxu0 %v592
    %737 = vmatprep.subr.bf16.mxu0 0
    %738 = vmatpush1.bf16.msra.mxu0 %v593
    %739 = vmatprep.subr.bf16.mxu0 0
    %740 = vmatpush1.bf16.msra.mxu0 %v594
    %741 = vmatprep.subr.bf16.mxu0 0
    %742 = vmatpush1.bf16.msra.mxu0 %v595
    %743 = vmatprep.subr.bf16.mxu0 0
    %744 = vmatpush1.bf16.msra.mxu0 %v596
    %745 = vmatprep.subr.bf16.mxu0 0
    %746 = vmatpush1.bf16.msra.mxu0 %v597
    %747 = vmatprep.mubr.bf16.mxu0 %v75
    %748 = vmatmul.mubr.bf16.gmra.mrb[0].mxu0 %v74
    %v749 = vpop.f32.mrb[0].mxu0
    %v750 = vadd.f32 0.0, %v749
    %v751 = vpop.f32.mrb[0].mxu0
    %v752 = vpop.f32.mrb[0].mxu0
    %v753 = vpop.f32.mrb[0].mxu0
    %754 = vdwg.mxu0
    %755 = vmatprep.subr.bf16.mxu0 0
    %756 = vmatpush1.bf16.msra.mxu0 %v598
    %757 = vmatprep.subr.bf16.mxu0 0
    %758 = vmatpush1.bf16.msra.mxu0 %v599
    %759 = vmatprep.subr.bf16.mxu0 0
    %760 = vmatpush1.bf16.msra.mxu0 %v600
    %761 = vmatprep.subr.bf16.mxu0 0
    %762 = vmatpush1.bf16.msra.mxu0 %v601
    %763 = vmatprep.subr.bf16.mxu0 0
    %764 = vmatpush1.bf16.msra.mxu0 %v602
    %765 = vmatprep.subr.bf16.mxu0 0
    %766 = vmatpush1.bf16.msra.mxu0 %v603
    %767 = vmatprep.subr.bf16.mxu0 0
    %768 = vmatpush1.bf16.msra.mxu0 %v604
    %769 = vmatprep.subr.bf16.mxu0 0
    %770 = vmatpush1.bf16.msra.mxu0 %v605
    %771 = vmatprep.subr.bf16.mxu0 0
    %772 = vmatpush1.bf16.msra.mxu0 %v606
    %773 = vmatprep.subr.bf16.mxu0 0
    %774 = vmatpush1.bf16.msra.mxu0 %v607
    %775 = vmatprep.subr.bf16.mxu0 0
    %776 = vmatpush1.bf16.msra.mxu0 %v608
    %777 = vmatprep.subr.bf16.mxu0 0
    %778 = vmatpush1.bf16.msra.mxu0 %v609
    %779 = vmatprep.subr.bf16.mxu0 0
    %780 = vmatpush1.bf16.msra.mxu0 %v610
    %781 = vmatprep.subr.bf16.mxu0 0
    %782 = vmatpush1.bf16.msra.mxu0 %v611
    %783 = vmatprep.subr.bf16.mxu0 0
    %784 = vmatpush1.bf16.msra.mxu0 %v612
    %785 = vmatprep.subr.bf16.mxu0 0
    %786 = vmatpush1.bf16.msra.mxu0 %v613
    %787 = vmatprep.mubr.bf16.mxu0 %v77
    %788 = vmatmul.mubr.bf16.gmra.mrb[0].mxu0 %v76
    %v789 = vpop.f32.mrb[0].mxu0
    %v790 = vadd.f32 %v750, %v789
    %v791 = vpop.f32.mrb[0].mxu0
    %v792 = vpop.f32.mrb[0].mxu0
    %v793 = vpop.f32.mrb[0].mxu0
    %794 = vdwg.mxu0
    %795 = vmatprep.subr.bf16.mxu0 0
    %796 = vmatpush1.bf16.msra.mxu0 %v614
    %797 = vmatprep.subr.bf16.mxu0 0
    %798 = vmatpush1.bf16.msra.mxu0 %v615
    %799 = vmatprep.subr.bf16.mxu0 0
    %800 = vmatpush1.bf16.msra.mxu0 %v616
    %801 = vmatprep.subr.bf16.mxu0 0
    %802 = vmatpush1.bf16.msra.mxu0 %v617
    %803 = vmatprep.subr.bf16.mxu0 0
    %804 = vmatpush1.bf16.msra.mxu0 %v618
    %805 = vmatprep.subr.bf16.mxu0 0
    %806 = vmatpush1.bf16.msra.mxu0 %v619
    %807 = vmatprep.subr.bf16.mxu0 0
    %808 = vmatpush1.bf16.msra.mxu0 %v620
    %809 = vmatprep.subr.bf16.mxu0 0
    %810 = vmatpush1.bf16.msra.mxu0 %v621
    %811 = vmatprep.subr.bf16.mxu0 0
    %812 = vmatpush1.bf16.msra.mxu0 %v622
    %813 = vmatprep.subr.bf16.mxu0 0
    %814 = vmatpush1.bf16.msra.mxu0 %v623
    %815 = vmatprep.subr.bf16.mxu0 0
    %816 = vmatpush1.bf16.msra.mxu0 %v624
    %817 = vmatprep.subr.bf16.mxu0 0
    %818 = vmatpush1.bf16.msra.mxu0 %v625
    %819 = vmatprep.subr.bf16.mxu0 0
    %820 = vmatpush1.bf16.msra.mxu0 %v626
    %821 = vmatprep.subr.bf16.mxu0 0
    %822 = vmatpush1.bf16.msra.mxu0 %v627
    %823 = vmatprep.subr.bf16.mxu0 0
    %824 = vmatpush1.bf16.msra.mxu0 %v628
    %825 = vmatprep.subr.bf16.mxu0 0
    %826 = vmatpush1.bf16.msra.mxu0 %v629
    %827 = vmatprep.mubr.bf16.mxu0 %v79
    %828 = vmatmul.mubr.bf16.gmra.mrb[0].mxu0 %v78
    %v829 = vpop.f32.mrb[0].mxu0
    %v830 = vadd.f32 %v790, %v829
    %v831 = vpop.f32.mrb[0].mxu0
    %v832 = vpop.f32.mrb[0].mxu0
    %v833 = vpop.f32.mrb[0].mxu0
    %834 = vdwg.mxu0
    %835 = vmatprep.subr.bf16.mxu0 0
    %836 = vmatpush1.bf16.msra.mxu0 %v630
    %837 = vmatprep.subr.bf16.mxu0 0
    %838 = vmatpush1.bf16.msra.mxu0 %v631
    %839 = vmatprep.subr.bf16.mxu0 0
    %840 = vmatpush1.bf16.msra.mxu0 %v632
    %841 = vmatprep.subr.bf16.mxu0 0
    %842 = vmatpush1.bf16.msra.mxu0 %v633
    %843 = vmatprep.subr.bf16.mxu0 0
    %844 = vmatpush1.bf16.msra.mxu0 %v634
    %845 = vmatprep.subr.bf16.mxu0 0
    %846 = vmatpush1.bf16.msra.mxu0 %v635
    %847 = vmatprep.subr.bf16.mxu0 0
    %848 = vmatpush1.bf16.msra.mxu0 %v636
    %849 = vmatprep.subr.bf16.mxu0 0
    %850 = vmatpush1.bf16.msra.mxu0 %v637
    %851 = vmatprep.subr.bf16.mxu0 0
    %852 = vmatpush1.bf16.msra.mxu0 %v638
    %853 = vmatprep.subr.bf16.mxu0 0
    %854 = vmatpush1.bf16.msra.mxu0 %v639
    %855 = vmatprep.subr.bf16.mxu0 0
    %856 = vmatpush1.bf16.msra.mxu0 %v640
    %857 = vmatprep.subr.bf16.mxu0 0
    %858 = vmatpush1.bf16.msra.mxu0 %v641
    %859 = vmatprep.subr.bf16.mxu0 0
    %860 = vmatpush1.bf16.msra.mxu0 %v642
    %861 = vmatprep.subr.bf16.mxu0 0
    %862 = vmatpush1.bf16.msra.mxu0 %v643
    %863 = vmatprep.subr.bf16.mxu0 0
    %864 = vmatpush1.bf16.msra.mxu0 %v713
    %865 = vmatprep.subr.bf16.mxu0 0
    %866 = vmatpush1.bf16.msra.mxu0 0
    %867 = vmatprep.mubr.bf16.mxu0 %v709
    %868 = vmatmul.mubr.bf16.gmra.mrb[0].mxu0 %v80
    %v869 = vpop.f32.mrb[0].mxu0
    %v870 = vadd.f32 %v830, %v869
    %v871 = vpop.f32.mrb[0].mxu0
    %v872 = vpop.f32.mrb[0].mxu0
    %v873 = vpop.f32.mrb[0].mxu0
    %874 = vdwg.mxu0
    %v1000 = vunpack.c.l.b16 %v82
    %v1001 = vunpack.c.l.b16 %v83
    %v1002 = vunpack.c.l.b16 %v84
    %v1003 = vunpack.c.l.b16 %v85
    %v1004 = vunpack.c.l.b16 %v86
    %v1005 = vunpack.c.l.b16 %v87
    %v1006 = vunpack.c.l.b16 %v88
    %v1007 = vunpack.c.l.b16 %v89
    %v1008 = vunpack.c.l.b16 %v90
    %v1009 = vunpack.c.l.b16 %v91
    %v1010 = vunpack.c.l.b16 %v92
    %v1011 = vunpack.c.l.b16 %v93
    %v1012 = vunpack.c.l.b16 %v94
    %v1013 = vunpack.c.l.b16 %v95
    %v1014 = vunpack.c.l.b16 %v96
    %v1015 = vunpack.c.l.b16 %v97
    %v1016 = vunpack.c.l.b16 %v98
    %v1017 = vunpack.c.l.b16 %v99
    %v1018 = vunpack.c.l.b16 %v100
    %v1019 = vunpack.c.l.b16 %v101
    %v1020 = vunpack.c.l.b16 %v102
    %v1021 = vunpack.c.l.b16 %v103
    %v1022 = vunpack.c.l.b16 %v104
    %v1023 = vunpack.c.l.b16 %v105
    %v1024 = vunpack.c.l.b16 %v106
    %v1025 = vunpack.c.l.b16 %v107
    %v1026 = vunpack.c.l.b16 %v108
    %v1027 = vunpack.c.l.b16 %v109
    %v1028 = vunpack.c.l.b16 %v110
    %v1029 = vunpack.c.l.b16 %v111
    %v1030 = vunpack.c.l.b16 %v112
    %v1031 = vunpack.c.l.b16 %v113
    %v1032 = vunpack.c.l.b16 %v114
    %v1033 = vunpack.c.l.b16 %v115
    %v1034 = vunpack.c.l.b16 %v116
    %v1035 = vunpack.c.l.b16 %v117
    %v1036 = vunpack.c.l.b16 %v118
    %v1037 = vunpack.c.l.b16 %v119
    %v1038 = vunpack.c.l.b16 %v120
    %v1039 = vunpack.c.l.b16 %v121
    %v1040 = vunpack.c.l.b16 %v122
    %v1041 = vunpack.c.l.b16 %v123
    %v1042 = vunpack.c.l.b16 %v124
    %v1043 = vunpack.c.l.b16 %v125
    %v1044 = vunpack.c.l.b16 %v126
    %v1045 = vunpack.c.l.b16 %v127
    %v1046 = vunpack.c.l.b16 %v128
    %v1047 = vunpack.c.l.b16 %v129
    %v1048 = vunpack.c.l.b16 %v130
    %v1049 = vunpack.c.l.b16 %v131
    %v1050 = vunpack.c.l.b16 %v132
    %v1051 = vunpack.c.l.b16 %v133
    %v1052 = vunpack.c.l.b16 %v134
    %v1053 = vunpack.c.l.b16 %v135
    %v1054 = vunpack.c.l.b16 %v136
    %v1055 = vunpack.c.l.b16 %v137
    %v1056 = vunpack.c.l.b16 %v138
    %v1057 = vunpack.c.l.b16 %v139
    %v1058 = vunpack.c.l.b16 %v140
    %v1059 = vunpack.c.l.b16 %v141
    %v1060 = vunpack.c.l.b16 %v142
    %v1061 = vunpack.c.l.b16 %v143
    %v1062 = vunpack.c.l.b16 %v144
    %v1063 = vunpack.c.l.b16 %v145
    %v1064 = vunpack.c.l.b16 %v146
    %v1065 = vunpack.c.l.b16 %v147
    %v1066 = vunpack.c.l.b16 %v148
    %v1067 = vunpack.c.l.b16 %v149
    %v1068 = vunpack.c.l.b16 %v150
    %v1069 = vunpack.c.l.b16 %v151
    %v1070 = vunpack.c.l.b16 %v152
    %v1071 = vunpack.c.l.b16 %v153
    %v1072 = vunpack.c.l.b16 %v154
    %v1073 = vunpack.c.l.b16 %v155
    %v1074 = vunpack.c.l.b16 %v156
    %v1075 = vunpack.c.l.b16 %v157
    %v1076 = vunpack.c.l.b16 %v158
    %v1077 = vunpack.c.l.b16 %v159
    %v1078 = vunpack.c.l.b16 %v160
    %v1079 = vunpack.c.l.b16 %v161
    %v1080 = vunpack.c.l.b16 %v162
    %v1081 = vunpack.c.l.b16 %v163
    %v1082 = vunpack.c.l.b16 %v164
    %v1083 = vunpack.c.l.b16 %v165
    %v1084 = vunpack.c.l.b16 %v166
    %v1085 = vunpack.c.l.b16 %v167
    %v1086 = vunpack.c.l.b16 %v168
    %v1087 = vunpack.c.l.b16 %v169
    %v1088 = vunpack.c.l.b16 %v170
    %v1089 = vunpack.c.l.b16 %v171
    %v1090 = vunpack.c.l.b16 %v172
    %v1091 = vunpack.c.l.b16 %v173
    %v1092 = vunpack.c.l.b16 %v174
    %v1093 = vunpack.c.l.b16 %v175
    %v1094 = vunpack.c.l.b16 %v176
    %v1095 = vunpack.c.l.b16 %v177
    %v1096 = vunpack.c.l.b16 %v178
    %v1097 = vunpack.c.l.b16 %v179
    %v1098 = vunpack.c.l.b16 %v180
    %v1099 = vunpack.c.l.b16 %v181
    %v1100 = vunpack.c.l.b16 %v182
    %v1101 = vunpack.c.l.b16 %v183
    %v1102 = vunpack.c.l.b16 %v184
    %v1103 = vunpack.c.l.b16 %v185
    %v1104 = vunpack.c.l.b16 %v186
    %v1105 = vunpack.c.l.b16 %v187
    %v1106 = vunpack.c.l.b16 %v188
    %v1107 = vunpack.c.l.b16 %v189
    %v1108 = vunpack.c.l.b16 %v190
    %v1109 = vunpack.c.l.b16 %v191
    %v1110 = vunpack.c.l.b16 %v192
    %v1111 = vunpack.c.l.b16 %v193
    %v1112 = vunpack.c.l.b16 %v194
    %v1113 = vunpack.c.l.b16 %v195
    %v1114 = vunpack.c.l.b16 %v196
    %v1115 = vunpack.c.l.b16 %v197
    %v1116 = vunpack.c.l.b16 %v198
    %v1117 = vunpack.c.l.b16 %v199
    %v1118 = vunpack.c.l.b16 %v200
    %v1119 = vunpack.c.l.b16 %v201
    %v1120 = vunpack.c.l.b16 %v202
    %v1121 = vunpack.c.l.b16 %v203
    %v1122 = vunpack.c.l.b16 %v204
    %v1123 = vunpack.c.l.b16 %v205
    %v1124 = vunpack.c.l.b16 %v206
    %v1125 = vpack.c.b16 %v1001, %v1000
    %v1126 = vpack.c.b16 %v1003, %v1002
    %v1127 = vpack.c.b16 %v1005, %v1004
    %v1128 = vpack.c.b16 %v1007, %v1006
    %v1129 = vpack.c.b16 %v1009, %v1008
    %v1130 = vpack.c.b16 %v1011, %v1010
    %v1131 = vpack.c.b16 %v1013, %v1012
    %v1132 = vpack.c.b16 %v1015, %v1014
    %v1133 = vpack.c.b16 %v1017, %v1016
    %v1134 = vpack.c.b16 %v1019, %v1018
    %v1135 = vpack.c.b16 %v1021, %v1020
    %v1136 = vpack.c.b16 %v1023, %v1022
    %v1137 = vpack.c.b16 %v1025, %v1024
    %v1138 = vpack.c.b16 %v1027, %v1026
    %v1139 = vpack.c.b16 %v1029, %v1028
    %v1140 = vpack.c.b16 %v1031, %v1030
    %v1141 = vpack.c.b16 %v1033, %v1032
    %v1142 = vpack.c.b16 %v1035, %v1034
    %v1143 = vpack.c.b16 %v1037, %v1036
    %v1144 = vpack.c.b16 %v1039, %v1038
    %v1145 = vpack.c.b16 %v1041, %v1040
    %v1146 = vpack.c.b16 %v1043, %v1042
    %v1147 = vpack.c.b16 %v1045, %v1044
    %v1148 = vpack.c.b16 %v1047, %v1046
    %v1149 = vpack.c.b16 %v1049, %v1048
    %v1150 = vpack.c.b16 %v1051, %v1050
    %v1151 = vpack.c.b16 %v1053, %v1052
    %v1152 = vpack.c.b16 %v1055, %v1054
    %v1153 = vpack.c.b16 %v1057, %v1056
    %v1154 = vpack.c.b16 %v1059, %v1058
    %v1155 = vpack.c.b16 %v1061, %v1060
    %v1156 = vpack.c.b16 %v1063, %v1062
    %v1157 = vpack.c.b16 %v1065, %v1064
    %v1158 = vpack.c.b16 %v1067, %v1066
    %v1159 = vpack.c.b16 %v1069, %v1068
    %v1160 = vpack.c.b16 %v1071, %v1070
    %v1161 = vpack.c.b16 %v1073, %v1072
    %v1162 = vpack.c.b16 %v1075, %v1074
    %v1163 = vpack.c.b16 %v1077, %v1076
    %v1164 = vpack.c.b16 %v1079, %v1078
    %v1165 = vpack.c.b16 %v1081, %v1080
    %v1166 = vpack.c.b16 %v1083, %v1082
    %v1167 = vpack.c.b16 %v1085, %v1084
    %v1168 = vpack.c.b16 %v1087, %v1086
    %v1169 = vpack.c.b16 %v1089, %v1088
    %v1170 = vpack.c.b16 %v1091, %v1090
    %v1171 = vpack.c.b16 %v1093, %v1092
    %v1172 = vpack.c.b16 %v1095, %v1094
    %v1173 = vpack.c.b16 %v1097, %v1096
    %v1174 = vpack.c.b16 %v1099, %v1098
    %v1175 = vpack.c.b16 %v1101, %v1100
    %v1176 = vpack.c.b16 %v1103, %v1102
    %v1177 = vpack.c.b16 %v1105, %v1104
    %v1178 = vpack.c.b16 %v1107, %v1106
    %v1179 = vpack.c.b16 %v1109, %v1108
    %v1180 = vpack.c.b16 %v1111, %v1110
    %v1181 = vpack.c.b16 %v1113, %v1112
    %v1182 = vpack.c.b16 %v1115, %v1114
    %v1183 = vpack.c.b16 %v1117, %v1116
    %v1184 = vpack.c.b16 %v1119, %v1118
    %v1185 = vpack.c.b16 %v1121, %v1120
    %v1186 = vpack.c.b16 %v1123, %v1122
    %v1187 = vpack.c.b16 %v1124, %v1124
    %v1251 = vsel %vm707, %v61, 0
    %v1254 = vsel %vm711, %v1187, 0
    %1256 = vmatprep.subr.bf16.mxu0 0
    %1257 = vmatpush1.bf16.msra.mxu0 %v1125
    %1258 = vmatprep.subr.bf16.mxu0 0
    %1259 = vmatpush1.bf16.msra.mxu0 %v1126
    %1260 = vmatprep.subr.bf16.mxu0 0
    %1261 = vmatpush1.bf16.msra.mxu0 %v1127
    %1262 = vmatprep.subr.bf16.mxu0 0
    %1263 = vmatpush1.bf16.msra.mxu0 %v1128
    %1264 = vmatprep.subr.bf16.mxu0 0
    %1265 = vmatpush1.bf16.msra.mxu0 %v1129
    %1266 = vmatprep.subr.bf16.mxu0 0
    %1267 = vmatpush1.bf16.msra.mxu0 %v1130
    %1268 = vmatprep.subr.bf16.mxu0 0
    %1269 = vmatpush1.bf16.msra.mxu0 %v1131
    %1270 = vmatprep.subr.bf16.mxu0 0
    %1271 = vmatpush1.bf16.msra.mxu0 %v1132
    %1272 = vmatprep.subr.bf16.mxu0 0
    %1273 = vmatpush1.bf16.msra.mxu0 %v1133
    %1274 = vmatprep.subr.bf16.mxu0 0
    %1275 = vmatpush1.bf16.msra.mxu0 %v1134
    %1276 = vmatprep.subr.bf16.mxu0 0
    %1277 = vmatpush1.bf16.msra.mxu0 %v1135
    %1278 = vmatprep.subr.bf16.mxu0 0
    %1279 = vmatpush1.bf16.msra.mxu0 %v1136
    %1280 = vmatprep.subr.bf16.mxu0 0
    %1281 = vmatpush1.bf16.msra.mxu0 %v1137
    %1282 = vmatprep.subr.bf16.mxu0 0
    %1283 = vmatpush1.bf16.msra.mxu0 %v1138
    %1284 = vmatprep.subr.bf16.mxu0 0
    %1285 = vmatpush1.bf16.msra.mxu0 %v1139
    %1286 = vmatprep.subr.bf16.mxu0 0
    %1287 = vmatpush1.bf16.msra.mxu0 %v1140
    %1288 = vmatprep.mubr.bf16.mxu0 %v55
    %1289 = vmatmul.mubr.bf16.gmra.mrb[0].mxu0 %v54
    %v1290 = vpop.f32.mrb[0].mxu0
    %v1291 = vadd.f32 %v870, %v1290
    %v1292 = vpop.f32.mrb[0].mxu0
    %v1293 = vpop.f32.mrb[0].mxu0
    %v1294 = vpop.f32.mrb[0].mxu0
    %1295 = vdwg.mxu0
    %1296 = vmatprep.subr.bf16.mxu0 0
    %1297 = vmatpush1.bf16.msra.mxu0 %v1141
    %1298 = vmatprep.subr.bf16.mxu0 0
    %1299 = vmatpush1.bf16.msra.mxu0 %v1142
    %1300 = vmatprep.subr.bf16.mxu0 0
    %1301 = vmatpush1.bf16.msra.mxu0 %v1143
    %1302 = vmatprep.subr.bf16.mxu0 0
    %1303 = vmatpush1.bf16.msra.mxu0 %v1144
    %1304 = vmatprep.subr.bf16.mxu0 0
    %1305 = vmatpush1.bf16.msra.mxu0 %v1145
    %1306 = vmatprep.subr.bf16.mxu0 0
    %1307 = vmatpush1.bf16.msra.mxu0 %v1146
    %1308 = vmatprep.subr.bf16.mxu0 0
    %1309 = vmatpush1.bf16.msra.mxu0 %v1147
    %1310 = vmatprep.subr.bf16.mxu0 0
    %1311 = vmatpush1.bf16.msra.mxu0 %v1148
    %1312 = vmatprep.subr.bf16.mxu0 0
    %1313 = vmatpush1.bf16.msra.mxu0 %v1149
    %1314 = vmatprep.subr.bf16.mxu0 0
    %1315 = vmatpush1.bf16.msra.mxu0 %v1150
    %1316 = vmatprep.subr.bf16.mxu0 0
    %1317 = vmatpush1.bf16.msra.mxu0 %v1151
    %1318 = vmatprep.subr.bf16.mxu0 0
    %1319 = vmatpush1.bf16.msra.mxu0 %v1152
    %1320 = vmatprep.subr.bf16.mxu0 0
    %1321 = vmatpush1.bf16.msra.mxu0 %v1153
    %1322 = vmatprep.subr.bf16.mxu0 0
    %1323 = vmatpush1.bf16.msra.mxu0 %v1154
    %1324 = vmatprep.subr.bf16.mxu0 0
    %1325 = vmatpush1.bf16.msra.mxu0 %v1155
    %1326 = vmatprep.subr.bf16.mxu0 0
    %1327 = vmatpush1.bf16.msra.mxu0 %v1156
    %1328 = vmatprep.mubr.bf16.mxu0 %v57
    %1329 = vmatmul.mubr.bf16.gmra.mrb[0].mxu0 %v56
    %v1330 = vpop.f32.mrb[0].mxu0
    %v1331 = vadd.f32 %v1291, %v1330
    %v1332 = vpop.f32.mrb[0].mxu0
    %v1333 = vpop.f32.mrb[0].mxu0
    %v1334 = vpop.f32.mrb[0].mxu0
    %1335 = vdwg.mxu0
    %1336 = vmatprep.subr.bf16.mxu0 0
    %1337 = vmatpush1.bf16.msra.mxu0 %v1157
    %1338 = vmatprep.subr.bf16.mxu0 0
    %1339 = vmatpush1.bf16.msra.mxu0 %v1158
    %1340 = vmatprep.subr.bf16.mxu0 0
    %1341 = vmatpush1.bf16.msra.mxu0 %v1159
    %1342 = vmatprep.subr.bf16.mxu0 0
    %1343 = vmatpush1.bf16.msra.mxu0 %v1160
    %1344 = vmatprep.subr.bf16.mxu0 0
    %1345 = vmatpush1.bf16.msra.mxu0 %v1161
    %1346 = vmatprep.subr.bf16.mxu0 0
    %1347 = vmatpush1.bf16.msra.mxu0 %v1162
    %1348 = vmatprep.subr.bf16.mxu0 0
    %1349 = vmatpush1.bf16.msra.mxu0 %v1163
    %1350 = vmatprep.subr.bf16.mxu0 0
    %1351 = vmatpush1.bf16.msra.mxu0 %v1164
    %1352 = vmatprep.subr.bf16.mxu0 0
    %1353 = vmatpush1.bf16.msra.mxu0 %v1165
    %1354 = vmatprep.subr.bf16.mxu0 0
    %1355 = vmatpush1.bf16.msra.mxu0 %v1166
    %1356 = vmatprep.subr.bf16.mxu0 0
    %1357 = vmatpush1.bf16.msra.mxu0 %v1167
    %1358 = vmatprep.subr.bf16.mxu0 0
    %1359 = vmatpush1.bf16.msra.mxu0 %v1168
    %1360 = vmatprep.subr.bf16.mxu0 0
    %1361 = vmatpush1.bf16.msra.mxu0 %v1169
    %1362 = vmatprep.subr.bf16.mxu0 0
    %1363 = vmatpush1.bf16.msra.mxu0 %v1170
    %1364 = vmatprep.subr.bf16.mxu0 0
    %1365 = vmatpush1.bf16.msra.mxu0 %v1171
    %1366 = vmatprep.subr.bf16.mxu0 0
    %1367 = vmatpush1.bf16.msra.mxu0 %v1172
    %1368 = vmatprep.mubr.bf16.mxu0 %v59
    %1369 = vmatmul.mubr.bf16.gmra.mrb[0].mxu0 %v58
    %v1370 = vpop.f32.mrb[0].mxu0
    %v1371 = vadd.f32 %v1331, %v1370
    %v1372 = vpop.f32.mrb[0].mxu0
    %v1373 = vpop.f32.mrb[0].mxu0
    %v1374 = vpop.f32.mrb[0].mxu0
    %1375 = vdwg.mxu0
    %1376 = vmatprep.subr.bf16.mxu0 0
    %1377 = vmatpush1.bf16.msra.mxu0 %v1173
    %1378 = vmatprep.subr.bf16.mxu0 0
    %1379 = vmatpush1.bf16.msra.mxu0 %v1174
    %1380 = vmatprep.subr.bf16.mxu0 0
    %1381 = vmatpush1.bf16.msra.mxu0 %v1175
    %1382 = vmatprep.subr.bf16.mxu0 0
    %1383 = vmatpush1.bf16.msra.mxu0 %v1176
    %1384 = vmatprep.subr.bf16.mxu0 0
    %1385 = vmatpush1.bf16.msra.mxu0 %v1177
    %1386 = vmatprep.subr.bf16.mxu0 0
    %1387 = vmatpush1.bf16.msra.mxu0 %v1178
    %1388 = vmatprep.subr.bf16.mxu0 0
    %1389 = vmatpush1.bf16.msra.mxu0 %v1179
    %1390 = vmatprep.subr.bf16.mxu0 0
    %1391 = vmatpush1.bf16.msra.mxu0 %v1180
    %1392 = vmatprep.subr.bf16.mxu0 0
    %1393 = vmatpush1.bf16.msra.mxu0 %v1181
    %1394 = vmatprep.subr.bf16.mxu0 0
    %1395 = vmatpush1.bf16.msra.mxu0 %v1182
    %1396 = vmatprep.subr.bf16.mxu0 0
    %1397 = vmatpush1.bf16.msra.mxu0 %v1183
    %1398 = vmatprep.subr.bf16.mxu0 0
    %1399 = vmatpush1.bf16.msra.mxu0 %v1184
    %1400 = vmatprep.subr.bf16.mxu0 0
    %1401 = vmatpush1.bf16.msra.mxu0 %v1185
    %1402 = vmatprep.subr.bf16.mxu0 0
    %1403 = vmatpush1.bf16.msra.mxu0 %v1186
    %1404 = vmatprep.subr.bf16.mxu0 0
    %1405 = vmatpush1.bf16.msra.mxu0 %v1254
    %1406 = vmatprep.subr.bf16.mxu0 0
    %1407 = vmatpush1.bf16.msra.mxu0 0
    %1408 = vmatprep.mubr.bf16.mxu0 %v1251
    %1409 = vmatmul.mubr.bf16.gmra.mrb[0].mxu0 %v60
    %v1410 = vpop.f32.mrb[0].mxu0
    %v1411 = vadd.f32 %v1371, %v1410
    %v1412 = vpop.f32.mrb[0].mxu0
    %v1413 = vpop.f32.mrb[0].mxu0
    %v1414 = vpop.f32.mrb[0].mxu0
    %1415 = vdwg.mxu0
    %v1416 = vld [vmem:[%s3] sm:$0x1]
    %v1418 = vlaneseq
    %v1419 = vshrl.u32 %v1418, 7
    %v1420 = vsub.s32 0, %v1419
    %v1421 = vrot.slane %v1416, %v1420
    %v1423 = vadd.f32 %v1411, %v1421
    %v1424 = vtanh.pop %v1423
    %1425 = vrot.lane.b32.xlu0 %v37, 19
    %v1426 = vpop.permute.xlu0 %1425
    %v1427 = vrot.slane %v1426, 4
    %1429 = vrot.lane.b32.xlu0 %v41, 19
    %v1430 = vpop.permute.xlu0 %1429
    %v1431 = vrot.slane %v1430, 4
    %v1433 = vsub.f32 %v1427, %v1431
    %1434 = vrot.lane.b32.xlu0 %v41, 22
    %v1435 = vpop.permute.xlu0 %1434
    %v1436 = vrot.slane %v1435, 4
    %v1438 = vsub.f32 %v1427, %v1436
    %1439 = vrot.lane.b32.xlu0 %v37, 22
    %v1440 = vpop.permute.xlu0 %1439
    %v1441 = vrot.slane %v1440, 4
    %v1443 = vsub.f32 %v1441, %v1431
    %1444 = vrot.lane.b32.xlu0 %v37, 24
    %v1445 = vpop.permute.xlu0 %1444
    %v1446 = vrot.slane %v1445, 4
    %1448 = vrot.lane.b32.xlu0 %v37, 21
    %v1449 = vpop.permute.xlu0 %1448
    %v1450 = vrot.slane %v1449, 4
    %v1452 = vadd.f32 %v1446, %v1450
    %v1453 = vmul.f32 %v1452, 0.5
    %1454 = vrot.lane.b32.xlu0 %v41, 24
    %v1455 = vpop.permute.xlu0 %1454
    %v1456 = vrot.slane %v1455, 4
    %1458 = vrot.lane.b32.xlu0 %v41, 21
    %v1459 = vpop.permute.xlu0 %1458
    %v1460 = vrot.slane %v1459, 4
    %v1462 = vadd.f32 %v1456, %v1460
    %v1463 = vmul.f32 %v1462, 0.5
    %v1464 = vsub.f32 %v1453, %v1463
    %1465 = vrot.lane.b32.xlu0 %v37, 23
    %v1466 = vpop.permute.xlu0 %1465
    %v1467 = vrot.slane %v1466, 4
    %1469 = vrot.lane.b32.xlu0 %v37, 20
    %v1470 = vpop.permute.xlu0 %1469
    %v1471 = vrot.slane %v1470, 4
    %v1473 = vadd.f32 %v1467, %v1471
    %v1474 = vmul.f32 %v1473, 0.5
    %1475 = vrot.lane.b32.xlu0 %v41, 23
    %v1476 = vpop.permute.xlu0 %1475
    %v1477 = vrot.slane %v1476, 4
    %1479 = vrot.lane.b32.xlu0 %v41, 20
    %v1480 = vpop.permute.xlu0 %1479
    %v1481 = vrot.slane %v1480, 4
    %v1483 = vadd.f32 %v1477, %v1481
    %v1484 = vmul.f32 %v1483, 0.5
    %v1485 = vsub.f32 %v1474, %v1484
    %v1486 = vadd.f32 %v1441, %v1427
    %v1487 = vmul.f32 %v1486, 0.5
    %v1488 = vadd.f32 %v1436, %v1431
    %v1489 = vmul.f32 %v1488, 0.5
    %v1490 = vsub.f32 %v1487, %v1489
    %v1491 = vmul.f32 %v1464, %v1464
    %v1492 = vmul.f32 %v1485, %v1485
    %v1493 = vadd.f32 %v1491, %v1492
    %v1494 = vmul.f32 %v1490, %v1490
    %v1495 = vadd.f32 %v1493, %v1494
    %v1496 = vrsqrt.pop %v1495
    %v1497 = vmul.f32 %v1495, %v1496
    %vm1498 = vcmp.eq.f32.partialorder %v1495, inf
    %v1499 = vsel %vm1498, %v1495, %v1497
    %vm1500 = vcmp.eq.f32.partialorder %v1495, 0.0
    %v1501 = vand.u32 %v1495, 2147483648
    %v1502 = vsel %vm1500, %v1501, %v1499
    %v1503 = vld [vmem:[%s6] sm:$0x1]
    %v1504 = vld [vmem:[%s5] sm:$0x1]
    %1506 = vset.pattern.permute.xlu0 0
    %1507 = vperm.xlu0 %1506, %v1433
    %v1508 = vpop.permute.xlu0 %1507
    %v1511 = vunpack.c.l.s4 839922192
    %v1512 = vunpack.c.0.s8 %v1511
    %v1513 = vlaneseq
    %v1514 = vshrl.u32 %v1513, 7
    %v1515 = vsub.s32 %v1512, %v1514
    %v1516 = vrot.slane %v1508, %v1515
    %v1517 = vlaneseq
    %v1518 = vshrl.u32 %v1517, 7
    %v1519 = vsub.s32 0, %v1518
    %v1520 = vrot.slane %v1504, %v1519
    %v1521 = vmul.f32 %v1516, %v1520
    %v1523 = vlaneseq
    %v1524 = vshrl.u32 %v1523, 7
    %v1525 = vsub.s32 0, %v1524
    %v1526 = vrot.slane %v1503, %v1525
    %v1528 = vadd.f32 %v1526, %v1521
    %v1529 = vld [vmem:[%s5 + $0x1] sm:$0x1]
    %1531 = vset.pattern.permute.xlu0 0
    %1532 = vperm.xlu0 %1531, %v1438
    %v1533 = vpop.permute.xlu0 %1532
    %v1536 = vunpack.c.l.s4 839922192
    %v1537 = vunpack.c.0.s8 %v1536
    %v1538 = vlaneseq
    %v1539 = vshrl.u32 %v1538, 7
    %v1540 = vsub.s32 %v1537, %v1539
    %v1541 = vrot.slane %v1533, %v1540
    %v1542 = vlaneseq
    %v1543 = vshrl.u32 %v1542, 7
    %v1544 = vsub.s32 0, %v1543
    %v1545 = vrot.slane %v1529, %v1544
    %v1546 = vmul.f32 %v1541, %v1545
    %v1547 = vadd.f32 %v1528, %v1546
    %v1548 = vld [vmem:[%s5 + $0x2] sm:$0x1]
    %1550 = vset.pattern.permute.xlu0 0
    %1551 = vperm.xlu0 %1550, %v1443
    %v1552 = vpop.permute.xlu0 %1551
    %v1555 = vunpack.c.l.s4 839922192
    %v1556 = vunpack.c.0.s8 %v1555
    %v1557 = vlaneseq
    %v1558 = vshrl.u32 %v1557, 7
    %v1559 = vsub.s32 %v1556, %v1558
    %v1560 = vrot.slane %v1552, %v1559
    %v1561 = vlaneseq
    %v1562 = vshrl.u32 %v1561, 7
    %v1563 = vsub.s32 0, %v1562
    %v1564 = vrot.slane %v1548, %v1563
    %v1565 = vmul.f32 %v1560, %v1564
    %v1566 = vadd.f32 %v1547, %v1565
    %v1567 = vld [vmem:[%s5 + $0x3] sm:$0x1]
    %1569 = vset.pattern.permute.xlu0 0
    %1570 = vperm.xlu0 %1569, %v1502
    %v1571 = vpop.permute.xlu0 %1570
    %v1574 = vunpack.c.l.s4 839922192
    %v1575 = vunpack.c.0.s8 %v1574
    %v1576 = vlaneseq
    %v1577 = vshrl.u32 %v1576, 7
    %v1578 = vsub.s32 %v1575, %v1577
    %v1579 = vrot.slane %v1571, %v1578
    %v1580 = vlaneseq
    %v1581 = vshrl.u32 %v1580, 7
    %v1582 = vsub.s32 0, %v1581
    %v1583 = vrot.slane %v1567, %v1582
    %v1584 = vmul.f32 %v1579, %v1583
    %v1585 = vadd.f32 %v1566, %v1584
    %1587 = vrot.lane.b32.xlu0 %v1585, 32
    %v1588 = vpop.permute.xlu0 %1587
    %vm1590 = vcmask 261120
    %v1591 = vsel %vm1590, %v1424, %v1588
    %v1592 = vpack.c.bf16 %v1591, %v1591
    %v1593 = vpack.c.bf16 %v1588, %v1588
    %v1594 = vld [vmem:[%s7] sm:$0xff]
    %v1595 = vld [vmem:[%s7 + $0x8] sm:$0xff]
    %v1596 = vld [vmem:[%s7 + $0x10] sm:$0xff]
    %v1597 = vld [vmem:[%s7 + $0x18] sm:$0xff]
    %v1598 = vld [vmem:[%s7 + $0x20] sm:$0xff]
    %v1599 = vld [vmem:[%s7 + $0x28] sm:$0xff]
    %v1600 = vld [vmem:[%s7 + $0x30] sm:$0xff]
    %v1601 = vld [vmem:[%s7 + $0x38] sm:$0xff]
    %v1602 = vld [vmem:[%s7 + $0x40] sm:$0xff]
    %v1603 = vld [vmem:[%s7 + $0x48] sm:$0xff]
    %v1604 = vld [vmem:[%s7 + $0x50] sm:$0xff]
    %v1605 = vld [vmem:[%s7 + $0x58] sm:$0xff]
    %v1606 = vld [vmem:[%s7 + $0x60] sm:$0xff]
    %v1607 = vld [vmem:[%s7 + $0x68] sm:$0xff]
    %v1608 = vld [vmem:[%s7 + $0x70] sm:$0xff]
    %v1609 = vld [vmem:[%s7 + $0x78] sm:$0xff]
    %v1610 = vld [vmem:[%s7 + $0x80] sm:$0xff]
    %v1611 = vld [vmem:[%s7 + $0x88] sm:$0xff]
    %v1612 = vld [vmem:[%s7 + $0x90] sm:$0xff]
    %v1613 = vld [vmem:[%s7 + $0x98] sm:$0xff]
    %v1614 = vld [vmem:[%s7 + $0xa0] sm:$0xff]
    %v1615 = vld [vmem:[%s7 + $0xa8] sm:$0xff]
    %v1616 = vld [vmem:[%s7 + $0xb0] sm:$0xff]
    %v1617 = vld [vmem:[%s7 + $0xb8] sm:$0xff]
    %v1618 = vld [vmem:[%s7 + $0xc0] sm:$0xff]
    %v1619 = vld [vmem:[%s7 + $0xc8] sm:$0xff]
    %v1620 = vld [vmem:[%s7 + $0xd0] sm:$0xff]
    %v1621 = vld [vmem:[%s7 + $0xd8] sm:$0xff]
    %v1622 = vld [vmem:[%s7 + $0xe0] sm:$0xff]
    %v1623 = vld [vmem:[%s7 + $0xe8] sm:$0xff]
    %v1624 = vld [vmem:[%s7 + $0xf0] sm:$0xff]
    %v1625 = vld [vmem:[%s7 + $0xf8] sm:$0xff]
    %v1626 = vld [vmem:[%s7 + $0x100] sm:$0xff]
    %v1627 = vld [vmem:[%s7 + $0x108] sm:$0xff]
    %v1628 = vld [vmem:[%s7 + $0x110] sm:$0xff]
    %v1629 = vld [vmem:[%s7 + $0x118] sm:$0xff]
    %v1630 = vld [vmem:[%s7 + $0x120] sm:$0xff]
    %v1631 = vld [vmem:[%s7 + $0x128] sm:$0xff]
    %v1632 = vld [vmem:[%s7 + $0x130] sm:$0xff]
    %v1633 = vld [vmem:[%s7 + $0x138] sm:$0xff]
    %v1634 = vld [vmem:[%s7 + $0x140] sm:$0xff]
    %v1635 = vld [vmem:[%s7 + $0x148] sm:$0xff]
    %v1636 = vld [vmem:[%s7 + $0x150] sm:$0xff]
    %v1637 = vld [vmem:[%s7 + $0x158] sm:$0xff]
    %v1638 = vld [vmem:[%s7 + $0x160] sm:$0xff]
    %v1639 = vld [vmem:[%s7 + $0x168] sm:$0xff]
    %v1640 = vld [vmem:[%s7 + $0x170] sm:$0xff]
    %v1641 = vld [vmem:[%s7 + $0x178] sm:$0xff]
    %v1642 = vld [vmem:[%s7 + $0x180] sm:$0xff]
    %v1643 = vld [vmem:[%s7 + $0x188] sm:$0xff]
    %v1644 = vld [vmem:[%s7 + $0x190] sm:$0xff]
    %v1645 = vld [vmem:[%s7 + $0x198] sm:$0xff]
    %v1646 = vld [vmem:[%s7 + $0x1a0] sm:$0xff]
    %v1647 = vld [vmem:[%s7 + $0x1a8] sm:$0xff]
    %v1648 = vld [vmem:[%s7 + $0x1b0] sm:$0xff]
    %v1649 = vld [vmem:[%s7 + $0x1b8] sm:$0xff]
    %v1650 = vld [vmem:[%s7 + $0x1c0] sm:$0xff]
    %v1651 = vld [vmem:[%s7 + $0x1c8] sm:$0xff]
    %v1652 = vld [vmem:[%s7 + $0x1d0] sm:$0xff]
    %v1653 = vld [vmem:[%s7 + $0x1d8] sm:$0xff]
    %v1654 = vld [vmem:[%s7 + $0x1e0] sm:$0xff]
    %v1655 = vld [vmem:[%s7 + $0x1e8] sm:$0xff]
    %v1656 = vld [vmem:[%s7 + $0x1f0] sm:$0xff]
    %v1657 = vld [vmem:[%s7 + $0x1f8] sm:$0xff]
    %v1658 = vld [vmem:[%s7 + $0x200] sm:$0x33]
    %v1659 = vld [vmem:[%s7 + $0x208] sm:$0x33]
    %v1660 = vld [vmem:[%s7 + $0x210] sm:$0x33]
    %v1661 = vld [vmem:[%s7 + $0x218] sm:$0x33]
    %v1662 = vld [vmem:[%s8] sm:$0xff]
    %v1664 = vlaneseq
    %v1665 = vshrl.u32 %v1664, 7
    %v1666 = vsub.s32 0, %v1665
    %v1667 = vrot.slane %v1662, %v1666
    %v1668 = vlaneseq
    %v1669 = vshrl.u32 %v1668, 7
    %v1670 = vsub.s32 1, %v1669
    %v1671 = vrot.slane %v1662, %v1670
    %v1672 = vlaneseq
    %v1673 = vshrl.u32 %v1672, 7
    %v1674 = vsub.s32 2, %v1673
    %v1675 = vrot.slane %v1662, %v1674
    %v1676 = vlaneseq
    %v1677 = vshrl.u32 %v1676, 7
    %v1678 = vsub.s32 3, %v1677
    %v1679 = vrot.slane %v1662, %v1678
    %v1680 = vlaneseq
    %v1681 = vshrl.u32 %v1680, 7
    %v1682 = vsub.s32 4, %v1681
    %v1683 = vrot.slane %v1662, %v1682
    %v1684 = vlaneseq
    %v1685 = vshrl.u32 %v1684, 7
    %v1686 = vsub.s32 5, %v1685
    %v1687 = vrot.slane %v1662, %v1686
    %v1688 = vlaneseq
    %v1689 = vshrl.u32 %v1688, 7
    %v1690 = vsub.s32 6, %v1689
    %v1691 = vrot.slane %v1662, %v1690
    %v1692 = vlaneseq
    %v1693 = vshrl.u32 %v1692, 7
    %v1694 = vsub.s32 7, %v1693
    %v1695 = vrot.slane %v1662, %v1694
    %v1772 = vunpack.c.l.b16 %v1594
    %v1773 = vunpack.c.h.b16 %v1594
    %v1774 = vunpack.c.l.b16 %v1595
    %v1775 = vunpack.c.h.b16 %v1595
    %v1776 = vunpack.c.l.b16 %v1596
    %v1777 = vunpack.c.h.b16 %v1596
    %v1778 = vunpack.c.l.b16 %v1597
    %v1779 = vunpack.c.h.b16 %v1597
    %v1780 = vunpack.c.l.b16 %v1598
    %v1781 = vunpack.c.h.b16 %v1598
    %v1782 = vunpack.c.l.b16 %v1599
    %v1783 = vunpack.c.h.b16 %v1599
    %v1784 = vunpack.c.l.b16 %v1600
    %v1785 = vunpack.c.h.b16 %v1600
    %v1786 = vunpack.c.l.b16 %v1601
    %v1787 = vunpack.c.h.b16 %v1601
    %v1788 = vunpack.c.l.b16 %v1602
    %v1789 = vunpack.c.h.b16 %v1602
    %v1790 = vunpack.c.l.b16 %v1603
    %v1791 = vunpack.c.h.b16 %v1603
    %v1792 = vunpack.c.l.b16 %v1604
    %v1793 = vunpack.c.h.b16 %v1604
    %v1794 = vunpack.c.l.b16 %v1605
    %v1795 = vunpack.c.h.b16 %v1605
    %v1796 = vunpack.c.l.b16 %v1606
    %v1797 = vunpack.c.h.b16 %v1606
    %v1798 = vunpack.c.l.b16 %v1607
    %v1799 = vunpack.c.h.b16 %v1607
    %v1800 = vunpack.c.l.b16 %v1608
    %v1801 = vunpack.c.h.b16 %v1608
    %v1802 = vunpack.c.l.b16 %v1609
    %v1803 = vunpack.c.h.b16 %v1609
    %v1804 = vunpack.c.l.b16 %v1610
    %v1805 = vunpack.c.h.b16 %v1610
    %v1806 = vunpack.c.l.b16 %v1611
    %v1807 = vunpack.c.h.b16 %v1611
    %v1808 = vunpack.c.l.b16 %v1612
    %v1809 = vunpack.c.h.b16 %v1612
    %v1810 = vunpack.c.l.b16 %v1613
    %v1811 = vunpack.c.h.b16 %v1613
    %v1812 = vunpack.c.l.b16 %v1614
    %v1813 = vunpack.c.h.b16 %v1614
    %v1814 = vunpack.c.l.b16 %v1615
    %v1815 = vunpack.c.h.b16 %v1615
    %v1816 = vunpack.c.l.b16 %v1616
    %v1817 = vunpack.c.h.b16 %v1616
    %v1818 = vunpack.c.l.b16 %v1617
    %v1819 = vunpack.c.h.b16 %v1617
    %v1820 = vunpack.c.l.b16 %v1618
    %v1821 = vunpack.c.h.b16 %v1618
    %v1822 = vunpack.c.l.b16 %v1619
    %v1823 = vunpack.c.h.b16 %v1619
    %v1824 = vunpack.c.l.b16 %v1620
    %v1825 = vunpack.c.h.b16 %v1620
    %v1826 = vunpack.c.l.b16 %v1621
    %v1827 = vunpack.c.h.b16 %v1621
    %v1828 = vunpack.c.l.b16 %v1622
    %v1829 = vunpack.c.h.b16 %v1622
    %v1830 = vunpack.c.l.b16 %v1623
    %v1831 = vunpack.c.h.b16 %v1623
    %v1832 = vunpack.c.l.b16 %v1624
    %v1833 = vunpack.c.h.b16 %v1624
    %v1834 = vunpack.c.l.b16 %v1625
    %v1835 = vunpack.c.h.b16 %v1625
    %v1836 = vunpack.c.l.b16 %v1626
    %v1837 = vunpack.c.h.b16 %v1626
    %v1838 = vunpack.c.l.b16 %v1627
    %v1839 = vunpack.c.h.b16 %v1627
    %v1840 = vunpack.c.l.b16 %v1628
    %v1841 = vunpack.c.h.b16 %v1628
    %v1842 = vunpack.c.l.b16 %v1629
    %v1843 = vunpack.c.h.b16 %v1629
    %v1844 = vunpack.c.l.b16 %v1630
    %v1845 = vunpack.c.h.b16 %v1630
    %v1846 = vunpack.c.l.b16 %v1631
    %v1847 = vunpack.c.h.b16 %v1631
    %v1848 = vunpack.c.l.b16 %v1632
    %v1849 = vunpack.c.h.b16 %v1632
    %v1850 = vunpack.c.l.b16 %v1633
    %v1851 = vunpack.c.h.b16 %v1633
    %v1852 = vunpack.c.l.b16 %v1634
    %v1853 = vunpack.c.h.b16 %v1634
    %v1854 = vunpack.c.l.b16 %v1635
    %v1855 = vunpack.c.h.b16 %v1635
    %v1856 = vunpack.c.l.b16 %v1636
    %v1857 = vunpack.c.h.b16 %v1636
    %v1858 = vunpack.c.l.b16 %v1637
    %v1859 = vunpack.c.h.b16 %v1637
    %v1860 = vunpack.c.l.b16 %v1638
    %v1861 = vunpack.c.h.b16 %v1638
    %v1862 = vunpack.c.l.b16 %v1639
    %v1863 = vunpack.c.h.b16 %v1639
    %v1864 = vunpack.c.l.b16 %v1640
    %v1865 = vunpack.c.h.b16 %v1640
    %v1866 = vunpack.c.l.b16 %v1641
    %v1867 = vunpack.c.h.b16 %v1641
    %v1868 = vunpack.c.l.b16 %v1642
    %v1869 = vunpack.c.h.b16 %v1642
    %v1870 = vunpack.c.l.b16 %v1643
    %v1871 = vunpack.c.h.b16 %v1643
    %v1872 = vunpack.c.l.b16 %v1644
    %v1873 = vunpack.c.h.b16 %v1644
    %v1874 = vunpack.c.l.b16 %v1645
    %v1875 = vunpack.c.h.b16 %v1645
    %v1876 = vunpack.c.l.b16 %v1646
    %v1877 = vunpack.c.h.b16 %v1646
    %v1878 = vunpack.c.l.b16 %v1647
    %v1879 = vunpack.c.h.b16 %v1647
    %v1880 = vunpack.c.l.b16 %v1648
    %v1881 = vunpack.c.h.b16 %v1648
    %v1882 = vunpack.c.l.b16 %v1649
    %v1883 = vunpack.c.h.b16 %v1649
    %v1884 = vunpack.c.l.b16 %v1650
    %v1885 = vunpack.c.h.b16 %v1650
    %v1886 = vunpack.c.l.b16 %v1651
    %v1887 = vunpack.c.h.b16 %v1651
    %v1888 = vunpack.c.l.b16 %v1652
    %v1889 = vunpack.c.h.b16 %v1652
    %v1890 = vunpack.c.l.b16 %v1653
    %v1891 = vunpack.c.h.b16 %v1653
    %v1892 = vunpack.c.l.b16 %v1654
    %v1893 = vunpack.c.h.b16 %v1654
    %v1894 = vunpack.c.l.b16 %v1655
    %v1895 = vunpack.c.h.b16 %v1655
    %v1896 = vunpack.c.l.b16 %v1656
    %v1897 = vunpack.c.h.b16 %v1656
    %v1898 = vunpack.c.l.b16 %v1657
    %v1899 = vunpack.c.h.b16 %v1657
    %v1900 = vunpack.c.l.b16 %v1658
    %v1901 = vunpack.c.h.b16 %v1658
    %v1902 = vunpack.c.l.b16 %v1659
    %v1903 = vunpack.c.h.b16 %v1659
    %v1904 = vunpack.c.l.b16 %v1660
    %v1905 = vunpack.c.h.b16 %v1660
    %v1906 = vunpack.c.l.b16 %v1661
    %v1907 = vunpack.c.h.b16 %v1661
    %v1908 = vpack.c.b16 %v1780, %v1772
    %v1909 = vpack.c.b16 %v1781, %v1773
    %v1910 = vpack.c.b16 %v1782, %v1774
    %v1911 = vpack.c.b16 %v1783, %v1775
    %v1912 = vpack.c.b16 %v1784, %v1776
    %v1913 = vpack.c.b16 %v1785, %v1777
    %v1914 = vpack.c.b16 %v1786, %v1778
    %v1915 = vpack.c.b16 %v1787, %v1779
    %v1916 = vpack.c.b16 %v1796, %v1788
    %v1917 = vpack.c.b16 %v1797, %v1789
    %v1918 = vpack.c.b16 %v1798, %v1790
    %v1919 = vpack.c.b16 %v1799, %v1791
    %v1920 = vpack.c.b16 %v1800, %v1792
    %v1921 = vpack.c.b16 %v1801, %v1793
    %v1922 = vpack.c.b16 %v1802, %v1794
    %v1923 = vpack.c.b16 %v1803, %v1795
    %v1924 = vpack.c.b16 %v1812, %v1804
    %v1925 = vpack.c.b16 %v1813, %v1805
    %v1926 = vpack.c.b16 %v1814, %v1806
    %v1927 = vpack.c.b16 %v1815, %v1807
    %v1928 = vpack.c.b16 %v1816, %v1808
    %v1929 = vpack.c.b16 %v1817, %v1809
    %v1930 = vpack.c.b16 %v1818, %v1810
    %v1931 = vpack.c.b16 %v1819, %v1811
    %v1932 = vpack.c.b16 %v1828, %v1820
    %v1933 = vpack.c.b16 %v1829, %v1821
    %v1934 = vpack.c.b16 %v1830, %v1822
    %v1935 = vpack.c.b16 %v1831, %v1823
    %v1936 = vpack.c.b16 %v1832, %v1824
    %v1937 = vpack.c.b16 %v1833, %v1825
    %v1938 = vpack.c.b16 %v1834, %v1826
    %v1939 = vpack.c.b16 %v1835, %v1827
    %v1940 = vpack.c.b16 %v1844, %v1836
    %v1941 = vpack.c.b16 %v1845, %v1837
    %v1942 = vpack.c.b16 %v1846, %v1838
    %v1943 = vpack.c.b16 %v1847, %v1839
    %v1944 = vpack.c.b16 %v1848, %v1840
    %v1945 = vpack.c.b16 %v1849, %v1841
    %v1946 = vpack.c.b16 %v1850, %v1842
    %v1947 = vpack.c.b16 %v1851, %v1843
    %v1948 = vpack.c.b16 %v1860, %v1852
    %v1949 = vpack.c.b16 %v1861, %v1853
    %v1950 = vpack.c.b16 %v1862, %v1854
    %v1951 = vpack.c.b16 %v1863, %v1855
    %v1952 = vpack.c.b16 %v1864, %v1856
    %v1953 = vpack.c.b16 %v1865, %v1857
    %v1954 = vpack.c.b16 %v1866, %v1858
    %v1955 = vpack.c.b16 %v1867, %v1859
    %v1956 = vpack.c.b16 %v1876, %v1868
    %v1957 = vpack.c.b16 %v1877, %v1869
    %v1958 = vpack.c.b16 %v1878, %v1870
    %v1959 = vpack.c.b16 %v1879, %v1871
    %v1960 = vpack.c.b16 %v1880, %v1872
    %v1961 = vpack.c.b16 %v1881, %v1873
    %v1962 = vpack.c.b16 %v1882, %v1874
    %v1963 = vpack.c.b16 %v1883, %v1875
    %v1964 = vpack.c.b16 %v1892, %v1884
    %v1965 = vpack.c.b16 %v1893, %v1885
    %v1966 = vpack.c.b16 %v1894, %v1886
    %v1967 = vpack.c.b16 %v1895, %v1887
    %v1968 = vpack.c.b16 %v1896, %v1888
    %v1969 = vpack.c.b16 %v1897, %v1889
    %v1970 = vpack.c.b16 %v1898, %v1890
    %v1971 = vpack.c.b16 %v1899, %v1891
    %v1972 = vpack.c.b16 %v1900, %v1900
    %v1973 = vpack.c.b16 %v1901, %v1901
    %v1974 = vpack.c.b16 %v1902, %v1902
    %v1975 = vpack.c.b16 %v1903, %v1903
    %v1976 = vpack.c.b16 %v1904, %v1904
    %v1977 = vpack.c.b16 %v1905, %v1905
    %v1978 = vpack.c.b16 %v1906, %v1906
    %v1979 = vpack.c.b16 %v1907, %v1907
    %vm2044 = vcmask 31744
    %v2046 = vsel %vm2044, %v1593, 0
    %vm2048 = vcmask 1041408
    %v2050 = vsel %vm2048, %v1972, 0
    %v2053 = vsel %vm2048, %v1973, 0
    %v2056 = vsel %vm2048, %v1974, 0
    %v2059 = vsel %vm2048, %v1975, 0
    %v2062 = vsel %vm2048, %v1976, 0
    %v2065 = vsel %vm2048, %v1977, 0
    %v2068 = vsel %vm2048, %v1978, 0
    %v2071 = vsel %vm2048, %v1979, 0
    %2073 = vmatprep.subr.bf16.mxu0 %v1909
    %2074 = vmatpush1.bf16.msra.mxu0 %v1908
    %2075 = vmatprep.subr.bf16.mxu0 %v1917
    %2076 = vmatpush1.bf16.msra.mxu0 %v1916
    %2077 = vmatprep.subr.bf16.mxu0 %v1925
    %2078 = vmatpush1.bf16.msra.mxu0 %v1924
    %2079 = vmatprep.subr.bf16.mxu0 %v1933
    %2080 = vmatpush1.bf16.msra.mxu0 %v1932
    %2081 = vmatprep.subr.bf16.mxu0 %v1941
    %2082 = vmatpush1.bf16.msra.mxu0 %v1940
    %2083 = vmatprep.subr.bf16.mxu0 %v1949
    %2084 = vmatpush1.bf16.msra.mxu0 %v1948
    %2085 = vmatprep.subr.bf16.mxu0 %v1957
    %2086 = vmatpush1.bf16.msra.mxu0 %v1956
    %2087 = vmatprep.subr.bf16.mxu0 %v1965
    %2088 = vmatpush1.bf16.msra.mxu0 %v1964
    %2089 = vmatprep.subr.bf16.mxu0 %v2053
    %2090 = vmatpush1.bf16.msra.mxu0 %v2050
    %2091 = vmatprep.subr.bf16.mxu0 0
    %2092 = vmatpush1.bf16.msra.mxu0 0
    %2093 = vmatprep.subr.bf16.mxu0 0
    %2094 = vmatpush1.bf16.msra.mxu0 0
    %2095 = vmatprep.subr.bf16.mxu0 0
    %2096 = vmatpush1.bf16.msra.mxu0 0
    %2097 = vmatprep.subr.bf16.mxu0 0
    %2098 = vmatpush1.bf16.msra.mxu0 0
    %2099 = vmatprep.subr.bf16.mxu0 0
    %2100 = vmatpush1.bf16.msra.mxu0 0
    %2101 = vmatprep.subr.bf16.mxu0 0
    %2102 = vmatpush1.bf16.msra.mxu0 0
    %2103 = vmatprep.subr.bf16.mxu0 0
    %2104 = vmatpush1.bf16.msra.mxu0 0
    %2105 = vmatprep.mubr.bf16.mxu0 %v2046
    %2106 = vmatmul.mubr.bf16.gmra.mrb[0].mxu0 %v1592
    %v2107 = vpop.f32.mrb[0].mxu0
    %v2108 = vadd.f32 %v1667, %v2107
    %v2109 = vpop.f32.mrb[0].mxu0
    %v2110 = vadd.f32 %v1671, %v2109
    %v2111 = vpop.f32.mrb[0].mxu0
    %v2112 = vpop.f32.mrb[0].mxu0
    %2113 = vdwg.mxu0
    %2114 = vmatprep.subr.bf16.mxu0 %v1911
    %2115 = vmatpush1.bf16.msra.mxu0 %v1910
    %2116 = vmatprep.subr.bf16.mxu0 %v1919
    %2117 = vmatpush1.bf16.msra.mxu0 %v1918
    %2118 = vmatprep.subr.bf16.mxu0 %v1927
    %2119 = vmatpush1.bf16.msra.mxu0 %v1926
    %2120 = vmatprep.subr.bf16.mxu0 %v1935
    %2121 = vmatpush1.bf16.msra.mxu0 %v1934
    %2122 = vmatprep.subr.bf16.mxu0 %v1943
    %2123 = vmatpush1.bf16.msra.mxu0 %v1942
    %2124 = vmatprep.subr.bf16.mxu0 %v1951
    %2125 = vmatpush1.bf16.msra.mxu0 %v1950
    %2126 = vmatprep.subr.bf16.mxu0 %v1959
    %2127 = vmatpush1.bf16.msra.mxu0 %v1958
    %2128 = vmatprep.subr.bf16.mxu0 %v1967
    %2129 = vmatpush1.bf16.msra.mxu0 %v1966
    %2130 = vmatprep.subr.bf16.mxu0 %v2059
    %2131 = vmatpush1.bf16.msra.mxu0 %v2056
    %2132 = vmatprep.subr.bf16.mxu0 0
    %2133 = vmatpush1.bf16.msra.mxu0 0
    %2134 = vmatprep.subr.bf16.mxu0 0
    %2135 = vmatpush1.bf16.msra.mxu0 0
    %2136 = vmatprep.subr.bf16.mxu0 0
    %2137 = vmatpush1.bf16.msra.mxu0 0
    %2138 = vmatprep.subr.bf16.mxu0 0
    %2139 = vmatpush1.bf16.msra.mxu0 0
    %2140 = vmatprep.subr.bf16.mxu0 0
    %2141 = vmatpush1.bf16.msra.mxu0 0
    %2142 = vmatprep.subr.bf16.mxu0 0
    %2143 = vmatpush1.bf16.msra.mxu0 0
    %2144 = vmatprep.subr.bf16.mxu0 0
    %2145 = vmatpush1.bf16.msra.mxu0 0
    %2146 = vmatprep.mubr.bf16.mxu0 %v2046
    %2147 = vmatmul.mubr.bf16.gmra.mrb[0].mxu0 %v1592
    %v2148 = vpop.f32.mrb[0].mxu0
    %v2149 = vadd.f32 %v1675, %v2148
    %v2150 = vpop.f32.mrb[0].mxu0
    %v2151 = vadd.f32 %v1679, %v2150
    %v2152 = vpop.f32.mrb[0].mxu0
    %v2153 = vpop.f32.mrb[0].mxu0
    %2154 = vdwg.mxu0
    %2155 = vmatprep.subr.bf16.mxu0 %v1913
    %2156 = vmatpush1.bf16.msra.mxu0 %v1912
    %2157 = vmatprep.subr.bf16.mxu0 %v1921
    %2158 = vmatpush1.bf16.msra.mxu0 %v1920
    %2159 = vmatprep.subr.bf16.mxu0 %v1929
    %2160 = vmatpush1.bf16.msra.mxu0 %v1928
    %2161 = vmatprep.subr.bf16.mxu0 %v1937
    %2162 = vmatpush1.bf16.msra.mxu0 %v1936
    %2163 = vmatprep.subr.bf16.mxu0 %v1945
    %2164 = vmatpush1.bf16.msra.mxu0 %v1944
    %2165 = vmatprep.subr.bf16.mxu0 %v1953
    %2166 = vmatpush1.bf16.msra.mxu0 %v1952
    %2167 = vmatprep.subr.bf16.mxu0 %v1961
    %2168 = vmatpush1.bf16.msra.mxu0 %v1960
    %2169 = vmatprep.subr.bf16.mxu0 %v1969
    %2170 = vmatpush1.bf16.msra.mxu0 %v1968
    %2171 = vmatprep.subr.bf16.mxu0 %v2065
    %2172 = vmatpush1.bf16.msra.mxu0 %v2062
    %2173 = vmatprep.subr.bf16.mxu0 0
    %2174 = vmatpush1.bf16.msra.mxu0 0
    %2175 = vmatprep.subr.bf16.mxu0 0
    %2176 = vmatpush1.bf16.msra.mxu0 0
    %2177 = vmatprep.subr.bf16.mxu0 0
    %2178 = vmatpush1.bf16.msra.mxu0 0
    %2179 = vmatprep.subr.bf16.mxu0 0
    %2180 = vmatpush1.bf16.msra.mxu0 0
    %2181 = vmatprep.subr.bf16.mxu0 0
    %2182 = vmatpush1.bf16.msra.mxu0 0
    %2183 = vmatprep.subr.bf16.mxu0 0
    %2184 = vmatpush1.bf16.msra.mxu0 0
    %2185 = vmatprep.subr.bf16.mxu0 0
    %2186 = vmatpush1.bf16.msra.mxu0 0
    %2187 = vmatprep.mubr.bf16.mxu0 %v2046
    %2188 = vmatmul.mubr.bf16.gmra.mrb[0].mxu0 %v1592
    %v2189 = vpop.f32.mrb[0].mxu0
    %v2190 = vadd.f32 %v1683, %v2189
    %v2191 = vpop.f32.mrb[0].mxu0
    %v2192 = vadd.f32 %v1687, %v2191
    %v2193 = vpop.f32.mrb[0].mxu0
    %v2194 = vpop.f32.mrb[0].mxu0
    %2195 = vdwg.mxu0
    %2196 = vmatprep.subr.bf16.mxu0 %v1915
    %2197 = vmatpush1.bf16.msra.mxu0 %v1914
    %2198 = vmatprep.subr.bf16.mxu0 %v1923
    %2199 = vmatpush1.bf16.msra.mxu0 %v1922
    %2200 = vmatprep.subr.bf16.mxu0 %v1931
    %2201 = vmatpush1.bf16.msra.mxu0 %v1930
    %2202 = vmatprep.subr.bf16.mxu0 %v1939
    %2203 = vmatpush1.bf16.msra.mxu0 %v1938
    %2204 = vmatprep.subr.bf16.mxu0 %v1947
    %2205 = vmatpush1.bf16.msra.mxu0 %v1946
    %2206 = vmatprep.subr.bf16.mxu0 %v1955
    %2207 = vmatpush1.bf16.msra.mxu0 %v1954
    %2208 = vmatprep.subr.bf16.mxu0 %v1963
    %2209 = vmatpush1.bf16.msra.mxu0 %v1962
    %2210 = vmatprep.subr.bf16.mxu0 %v1971
    %2211 = vmatpush1.bf16.msra.mxu0 %v1970
    %2212 = vmatprep.subr.bf16.mxu0 %v2071
    %2213 = vmatpush1.bf16.msra.mxu0 %v2068
    %2214 = vmatprep.subr.bf16.mxu0 0
    %2215 = vmatpush1.bf16.msra.mxu0 0
    %2216 = vmatprep.subr.bf16.mxu0 0
    %2217 = vmatpush1.bf16.msra.mxu0 0
    %2218 = vmatprep.subr.bf16.mxu0 0
    %2219 = vmatpush1.bf16.msra.mxu0 0
    %2220 = vmatprep.subr.bf16.mxu0 0
    %2221 = vmatpush1.bf16.msra.mxu0 0
    %2222 = vmatprep.subr.bf16.mxu0 0
    %2223 = vmatpush1.bf16.msra.mxu0 0
    %2224 = vmatprep.subr.bf16.mxu0 0
    %2225 = vmatpush1.bf16.msra.mxu0 0
    %2226 = vmatprep.subr.bf16.mxu0 0
    %2227 = vmatpush1.bf16.msra.mxu0 0
    %2228 = vmatprep.mubr.bf16.mxu0 %v2046
    %2229 = vmatmul.mubr.bf16.gmra.mrb[0].mxu0 %v1592
    %v2230 = vpop.f32.mrb[0].mxu0
    %v2231 = vadd.f32 %v1691, %v2230
    %v2232 = vpop.f32.mrb[0].mxu0
    %v2233 = vadd.f32 %v1695, %v2232
    %v2234 = vpop.f32.mrb[0].mxu0
    %v2235 = vpop.f32.mrb[0].mxu0
    %2236 = vdwg.mxu0
    %v2237 = vtanh.pop %v2108
    %v2238 = vtanh.pop %v2110
    %v2239 = vtanh.pop %v2149
    %v2240 = vtanh.pop %v2151
    %v2241 = vtanh.pop %v2190
    %v2242 = vtanh.pop %v2192
    %v2243 = vtanh.pop %v2231
    %v2244 = vtanh.pop %v2233
    %v2245 = vmax.f32 %v1446, %v1456
    %v2246 = vmin.f32 %v1450, %v1460
    %2248 = vrot.lane.b32.xlu0 %v2246, 3
    %v2249 = vpop.permute.xlu0 %2248
    %vm2251 = vcmask 23552
    %v2252 = vsel %vm2251, %v2245, %v2249
    %v2261 = vcombine.low %v2237, %v2238
    %v2262 = vcombine.low %v2239, %v2240
    %v2263 = vcombine.low %v2241, %v2242
    %v2264 = vcombine.low %v2243, %v2244
    %2269 = vst [vmem:[#allocation2] sm:$0xff] %v2261
    %2270 = vst [vmem:[#allocation2 + $0x8] sm:$0xff] %v2262
    %2271 = vst [vmem:[#allocation2 + $0x10] sm:$0xff] %v2263
    %vm2272 = vcmask 850948
    %vm2273 = vmor %vm2272, %vm711
    %2274 = vst.msk [vmem:[#allocation2 + $0x18] sm:$0xff] %vm2273, %v2264
    %2276 = vrot.lane.b32.xlu0 %v2252, 104
    %v2277 = vpop.permute.xlu0 %2276
    %vm2279 = vcmask 896832
    %2280 = vst.msk [vmem:[#allocation2 + $0x1c] sm:$0xf] %vm2279, %v2277
    // Predicated region
    $region38: #{tpu_custom_call.1} parent=1 // pred_check
      _
    $region39: #{tpu_custom_call.1} parent=1 // pred_check_branch
      %2282 = sbr.rel (0) target = $region41
    $region40: #{tpu_custom_call.1} parent=1 // pred_region
      %s2284 = ssub.s32 512, 512
      %2285 = vsyncadd [#allocation3], %s2284
      %s2287 = sshll.u32 [#allocation2], 4
      %s2288 = int_to_ptr.vmem [resolvable:$true] %s2287
      %2290 = dma.vmem_to_hbm [thread:$0]  %s2288, 512, %s9, [#allocation3]
    $region41: #{tpu_custom_call.1} parent=1 // pred_fallthru
      _
    // Predicated region
    $region42: #{tpu_custom_call.1} parent=1 // pred_check
      _
    $region43: #{tpu_custom_call.1} parent=1 // pred_check_branch
      %2292 = sbr.rel (0) target = $region45
    $region44: #{tpu_custom_call.1} parent=1 // pred_region
      %2293 = dma.done [#allocation3], 512
    $region45: #{tpu_custom_call.1} parent=1 // pred_fallthru
      _
    %2294 = vsyncpa [#allocation3], 1

</llo_original>
